<compile_context>
chip_gen: v5e
topology: v5e:2x2
jax: 0.10.0
libtpu: 0.0.40
codegen_flags: <defaults>
</compile_context>

<pallas_src>
import functools

import jax
import jax.numpy as jnp
from jax.experimental import pallas as pl
from jax.experimental.pallas import tpu as pltpu


def _mlp_body(seed_ref, x_ref, w0_ref, w1_ref, w2_ref, wc_ref, o_ref,
              dropout_p, training):
    """One batch tile of the MLP.

    x_ref : (TM, IN)     bf16  activation tile
    w*_ref: (in, out)    bf16  resident weights (x @ W layout)
    wc_ref: (1, H_last)  f32   head weights as a row vector
    o_ref : (1, TM)      f32   lane-dense output tile
    """
    # fc_layer_0..2: MXU matmuls with bf16 operands / f32 accumulation, ReLU in f32.
    h = jnp.dot(x_ref[...], w0_ref[...], preferred_element_type=jnp.float32)
    h = jnp.maximum(h, 0.0)
    h = jnp.dot(h.astype(jnp.bfloat16), w1_ref[...],
                preferred_element_type=jnp.float32)
    h = jnp.maximum(h, 0.0)
    h = jnp.dot(h.astype(jnp.bfloat16), w2_ref[...],
                preferred_element_type=jnp.float32)
    h = jnp.maximum(h, 0.0)

    if training and dropout_p > 0.0:
        # Training-mode (inverted) dropout with the on-chip PRNG.  Mixing the grid
        # index into the seed gives every batch tile an independent mask.
        # TODO(synk): cannot reproduce PyTorch's exact RNG stream, only its distribution.
        pltpu.prng_seed(seed_ref[0] + pl.program_id(0))
        bits = pltpu.bitcast(pltpu.prng_random_bits(h.shape), jnp.uint32)
        keep_thresh = jnp.uint32(
            min(int((1.0 - dropout_p) * float(1 << 32)), (1 << 32) - 1))
        keep = bits < keep_thresh
        h = jnp.where(keep, h * (1.0 / (1.0 - dropout_p)), 0.0)
    # else: eval-mode dropout is the identity.

    # fc_class (H_last -> 1): VPU multiply + cross-lane reduction instead of a
    # degenerate N=1 MXU matmul; stored as an unmasked, lane-dense (1, TM) tile.
    y = jnp.sum(h * wc_ref[...], axis=-1)      # (TM,)
    o_ref[...] = y[None, :]                    # (1, TM)


def _mlp_kernel_eval(x_ref, w0_ref, w1_ref, w2_ref, wc_ref, o_ref):
    _mlp_body(None, x_ref, w0_ref, w1_ref, w2_ref, wc_ref, o_ref,
              dropout_p=0.0, training=False)


def _mlp_kernel_train(seed_ref, x_ref, w0_ref, w1_ref, w2_ref, wc_ref, o_ref,
                      *, dropout_p):
    _mlp_body(seed_ref, x_ref, w0_ref, w1_ref, w2_ref, wc_ref, o_ref,
              dropout_p=dropout_p, training=True)


def _choose_tm(in_features, hidden, vmem_budget_bytes=24 * 1024 * 1024):
    """Largest batch tile (multiple of 128) whose working set fits comfortably in
    VMEM on every generation (v7x has only 64 MiB physical / 32 MiB scoped)."""
    h0, h1, h2 = hidden
    w_bytes = 2 * (in_features * h0 + h0 * h1 + h1 * h2) + 4 * h2   # resident weights
    for tm in (1024, 512, 256, 128):
        x_bytes = 2 * (tm * in_features * 2)     # double-buffered bf16 x tile
        o_bytes = 2 * (tm * 4)                   # double-buffered f32 out tile
        inter = 4 * tm * (h0 + h1 + h2)          # f32 intermediates (upper bound)
        if w_bytes + x_bytes + o_bytes + inter <= vmem_budget_bytes:
            return tm
    return 128


def mlp_forward(x, w0, w1, w2, wc, *, dropout_p=0.5, training=False, seed=0,
                tm=None):
    """x: (B, IN) f32.  w0/w1/w2: (in, out) f32.  wc: (H_last, 1) f32. Returns (B, 1) f32."""
    B, in_features = x.shape
    h0, h1, h2 = w0.shape[1], w1.shape[1], w2.shape[1]

    if tm is None:
        tm = _choose_tm(in_features, (h0, h1, h2))
    if tm % 128 != 0:
        raise ValueError("tm must be a multiple of 128 for lane-dense output tiles")

    # Pad batch to a whole number of tiles (padded rows are zero and sliced off below).
    num_tiles = pl.cdiv(B, tm)
    b_pad = num_tiles * tm
    if b_pad != B:
        x = jnp.pad(x, ((0, b_pad - B), (0, 0)))

    # bf16 operands for the MXU; accumulation stays f32 inside the kernel.
    xb = x.astype(jnp.bfloat16)
    w0b = w0.astype(jnp.bfloat16)
    w1b = w1.astype(jnp.bfloat16)
    w2b = w2.astype(jnp.bfloat16)
    wc_row = wc.reshape(1, h2).astype(jnp.float32)   # head weights as a row vector

    if training and dropout_p > 0.0:
        kernel = functools.partial(_mlp_kernel_train, dropout_p=dropout_p)
        num_prefetch = 1
        in_specs = [
            pl.BlockSpec((tm, in_features), lambda i, s: (i, 0)),
            pl.BlockSpec((in_features, h0), lambda i, s: (0, 0)),
            pl.BlockSpec((h0, h1), lambda i, s: (0, 0)),
            pl.BlockSpec((h1, h2), lambda i, s: (0, 0)),
            pl.BlockSpec((1, h2), lambda i, s: (0, 0)),
        ]
        out_specs = pl.BlockSpec((1, tm), lambda i, s: (0, i))
        args = (jnp.array([seed], dtype=jnp.int32), xb, w0b, w1b, w2b, wc_row)
    else:
        kernel = _mlp_kernel_eval
        num_prefetch = 0
        in_specs = [
            pl.BlockSpec((tm, in_features), lambda i: (i, 0)),
            pl.BlockSpec((in_features, h0), lambda i: (0, 0)),
            pl.BlockSpec((h0, h1), lambda i: (0, 0)),
            pl.BlockSpec((h1, h2), lambda i: (0, 0)),
            pl.BlockSpec((1, h2), lambda i: (0, 0)),
        ]
        out_specs = pl.BlockSpec((1, tm), lambda i: (0, i))
        args = (xb, w0b, w1b, w2b, wc_row)

    out = pl.pallas_call(
        kernel,
        out_shape=jax.ShapeDtypeStruct((1, b_pad), jnp.float32),
        grid_spec=pltpu.PrefetchScalarGridSpec(
            num_scalar_prefetch=num_prefetch,
            grid=(num_tiles,),
            in_specs=in_specs,
            out_specs=out_specs,
        ),
        compiler_params=pltpu.CompilerParams(
            # Batch tiles are independent: shard across TensorCores (2 TCs on v7x).
            dimension_semantics=("parallel",),
            # Equal to the default scoped limit on v6e/v7x; actual usage here is a
            # couple of MiB, leaving ample double-buffering headroom on all gens.
            vmem_limit_bytes=32 * 1024 * 1024,
        ),
    )(*args)

    return out[0, :B].reshape(B, 1)


def _init_linear_weight(key, in_features, out_features):
    # PyTorch nn.Linear default init: U(-1/sqrt(in), 1/sqrt(in)) on (out, in);
    # stored transposed as (in, out) so the kernel computes x @ W.
    bound = 1.0 / jnp.sqrt(jnp.float32(in_features))
    w = jax.random.uniform(key, (out_features, in_features),
                           minval=-bound, maxval=bound, dtype=jnp.float32)
    return w.T


def _reference(x, w0, w1, w2, wc):
    # Eval-mode reference with the same bf16-operand / f32-accumulation numerics.
    b16 = jnp.bfloat16
    h = jnp.maximum(jnp.dot(x.astype(b16), w0.astype(b16),
                            preferred_element_type=jnp.float32), 0.0)
    h = jnp.maximum(jnp.dot(h.astype(b16), w1.astype(b16),
                            preferred_element_type=jnp.float32), 0.0)
    h = jnp.maximum(jnp.dot(h.astype(b16), w2.astype(b16),
                            preferred_element_type=jnp.float32), 0.0)
    return h @ wc            # eval-mode dropout = identity


if __name__ == "__main__":
    # Small shapes consistent with the module (3 hidden layers + 1-unit head).
    # batch=200 is deliberately not a multiple of the 128-row tile so the run
    # exercises batch padding and a 2-step pipelined grid.
    input_size = 512
    hidden_size = [256, 128, 32]
    batch = 200

    key = jax.random.PRNGKey(0)
    kx, k0, k1, k2, kc = jax.random.split(key, 5)

    x = jax.random.normal(kx, (batch, input_size), dtype=jnp.float32)
    w0 = _init_linear_weight(k0, input_size, hidden_size[0])
    w1 = _init_linear_weight(k1, hidden_size[0], hidden_size[1])
    w2 = _init_linear_weight(k2, hidden_size[1], hidden_size[2])
    wc = _init_linear_weight(kc, hidden_size[2], 1)

    out = mlp_forward(x, w0, w1, w2, wc, dropout_p=0.5, training=False, tm=128)
    out = jax.block_until_ready(out)

    ref = _reference(x, w0, w1, w2, wc)
    assert out.shape == (batch, 1), out.shape
    assert jnp.allclose(out, ref, atol=2e-2, rtol=2e-2), "mismatch vs pure-JAX reference"

    print("KERNEL_OK")
</pallas_src>

<mosaic_0001>
module attributes {stable_mosaic.version = 11 : i64} {
  func.func @_mlp_kernel_eval(%arg0: i32, %arg1: memref<128x512xbf16, #tpu.memory_space<vmem>>, %arg2: memref<512x256xbf16, #tpu.memory_space<vmem>>, %arg3: memref<256x128xbf16, #tpu.memory_space<vmem>>, %arg4: memref<128x32xbf16, #tpu.memory_space<vmem>>, %arg5: memref<1x32xf32, #tpu.memory_space<vmem>>, %arg6: memref<1x128xf32, #tpu.memory_space<vmem>>) attributes {dimension_semantics = [#tpu.dimension_semantics<parallel>], iteration_bounds = array<i64: 2>, scalar_prefetch = 0 : i64, scratch_operands = 0 : i64, tpu.core_type = #tpu.core_type<tc>, window_params = [{transform_indices = @transform_0, window_bounds = array<i64: 128, 512>}, {pipeline_mode = #tpu.pipeline_mode<synchronous>, transform_indices = @transform_1, window_bounds = array<i64: 512, 256>}, {pipeline_mode = #tpu.pipeline_mode<synchronous>, transform_indices = @transform_2, window_bounds = array<i64: 256, 128>}, {pipeline_mode = #tpu.pipeline_mode<synchronous>, transform_indices = @transform_3, window_bounds = array<i64: 128, 32>}, {pipeline_mode = #tpu.pipeline_mode<synchronous>, transform_indices = @transform_4, window_bounds = array<i64: 1, 32>}, {transform_indices = @transform_5, window_bounds = array<i64: 1, 128>}]} {
    %c0 = arith.constant 0 : index
    %c0_0 = arith.constant 0 : index
    %0 = vector.load %arg1[%c0, %c0_0] : memref<128x512xbf16, #tpu.memory_space<vmem>>, vector<128x512xbf16>
    %c0_1 = arith.constant 0 : index
    %c0_2 = arith.constant 0 : index
    %1 = vector.load %arg2[%c0_1, %c0_2] : memref<512x256xbf16, #tpu.memory_space<vmem>>, vector<512x256xbf16>
    %cst = arith.constant dense<0.000000e+00> : vector<128x256xf32>
    %2 = tpu.matmul %0, %1, %cst {dimension_numbers = #tpu.dot_dimension_numbers<[1], [0], [0], [1], [0, 0, 1, 1], [], []>} : vector<128x512xbf16>, vector<512x256xbf16>, vector<128x256xf32> -> vector<128x256xf32>
    %cst_3 = arith.constant 0.000000e+00 : f32
    %3 = vector.broadcast %cst_3 : f32 to vector<128x256xf32>
    %4 = arith.maximumf %2, %3 : vector<128x256xf32>
    %5 = arith.truncf %4 : vector<128x256xf32> to vector<128x256xbf16>
    %c0_4 = arith.constant 0 : index
    %c0_5 = arith.constant 0 : index
    %6 = vector.load %arg3[%c0_4, %c0_5] : memref<256x128xbf16, #tpu.memory_space<vmem>>, vector<256x128xbf16>
    %cst_6 = arith.constant dense<0.000000e+00> : vector<128x128xf32>
    %7 = tpu.matmul %5, %6, %cst_6 {dimension_numbers = #tpu.dot_dimension_numbers<[1], [0], [0], [1], [0, 0, 1, 1], [], []>} : vector<128x256xbf16>, vector<256x128xbf16>, vector<128x128xf32> -> vector<128x128xf32>
    %cst_7 = arith.constant 0.000000e+00 : f32
    %8 = vector.broadcast %cst_7 : f32 to vector<128x128xf32>
    %9 = arith.maximumf %7, %8 : vector<128x128xf32>
    %10 = arith.truncf %9 : vector<128x128xf32> to vector<128x128xbf16>
    %c0_8 = arith.constant 0 : index
    %c0_9 = arith.constant 0 : index
    %11 = vector.load %arg4[%c0_8, %c0_9] : memref<128x32xbf16, #tpu.memory_space<vmem>>, vector<128x32xbf16>
    %cst_10 = arith.constant dense<0.000000e+00> : vector<128x32xf32>
    %12 = tpu.matmul %10, %11, %cst_10 {dimension_numbers = #tpu.dot_dimension_numbers<[1], [0], [0], [1], [0, 0, 1, 1], [], []>} : vector<128x128xbf16>, vector<128x32xbf16>, vector<128x32xf32> -> vector<128x32xf32>
    %cst_11 = arith.constant 0.000000e+00 : f32
    %13 = vector.broadcast %cst_11 : f32 to vector<128x32xf32>
    %14 = arith.maximumf %12, %13 : vector<128x32xf32>
    %c0_12 = arith.constant 0 : index
    %c0_13 = arith.constant 0 : index
    %15 = vector.load %arg5[%c0_12, %c0_13] : memref<1x32xf32, #tpu.memory_space<vmem>>, vector<1x32xf32>
    %16 = vector.broadcast %15 : vector<1x32xf32> to vector<128x32xf32>
    %17 = arith.mulf %14, %16 : vector<128x32xf32>
    %cst_14 = arith.constant dense<0.000000e+00> : vector<128xf32>
    %18 = vector.multi_reduction <add>, %17, %cst_14 [1] : vector<128x32xf32> to vector<128xf32>
    %19 = vector.shape_cast %18 : vector<128xf32> to vector<1x128xf32>
    %c0_15 = arith.constant 0 : index
    %c0_16 = arith.constant 0 : index
    %20 = vector.load %arg6[%c0_15, %c0_16] : memref<1x128xf32, #tpu.memory_space<vmem>>, vector<1x128xf32>
    tpu.vector_store %arg6[%c0_15, %c0_16], %19 {strides = array<i32>} : memref<1x128xf32, #tpu.memory_space<vmem>>, vector<1x128xf32>,
    return
  }
  func.func @transform_0(%arg0: i32) -> (i32, i32) {
    %c0_i32 = arith.constant 0 : i32
    %c0_i32_0 = arith.constant 0 : i32
    return %arg0, %c0_i32 : i32, i32
  }
  func.func @transform_1(%arg0: i32) -> (i32, i32) {
    %c0_i32 = arith.constant 0 : i32
    %c0_i32_0 = arith.constant 0 : i32
    %c0_i32_1 = arith.constant 0 : i32
    return %c0_i32, %c0_i32_0 : i32, i32
  }
  func.func @transform_2(%arg0: i32) -> (i32, i32) {
    %c0_i32 = arith.constant 0 : i32
    %c0_i32_0 = arith.constant 0 : i32
    %c0_i32_1 = arith.constant 0 : i32
    return %c0_i32, %c0_i32_0 : i32, i32
  }
  func.func @transform_3(%arg0: i32) -> (i32, i32) {
    %c0_i32 = arith.constant 0 : i32
    %c0_i32_0 = arith.constant 0 : i32
    %c0_i32_1 = arith.constant 0 : i32
    return %c0_i32, %c0_i32_0 : i32, i32
  }
  func.func @transform_4(%arg0: i32) -> (i32, i32) {
    %c0_i32 = arith.constant 0 : i32
    %c0_i32_0 = arith.constant 0 : i32
    %c0_i32_1 = arith.constant 0 : i32
    return %c0_i32, %c0_i32_0 : i32, i32
  }
  func.func @transform_5(%arg0: i32) -> (i32, i32) {
    %c0_i32 = arith.constant 0 : i32
    %c0_i32_0 = arith.constant 0 : i32
    return %c0_i32, %arg0 : i32, i32
  }
}

</mosaic_0001>

<llo_original>
// kernel: tpu_custom_call.1
$region0: #{tpu_custom_call.1}
  #allocation0 [shape = 'u32[]', space=smem, size = 0x4, offset = 0x4, fixed_abs, tag = 'smem constant byte address 0x4 - core index']
  #allocation1 [shape = 'u32[72,128]{1,0:T(1,128)}', space=vmem, size = 0x9000, scoped, tag = 'internal scratch']
  %s0 = inlined_call_operand.hbm [shape: bf16[256,512], index: 0, kind: input, shape index: {}]
  %s1 = inlined_call_operand.hbm [shape: bf16[512,256], index: 1, kind: input, shape index: {}]
  %s2 = inlined_call_operand.hbm [shape: bf16[256,128], index: 2, kind: input, shape index: {}]
  %s3 = inlined_call_operand.vmem [shape: bf16[128,32], index: 3, kind: input, shape index: {}]
  %s4 = inlined_call_operand.vmem [shape: f32[1,32], index: 4, kind: input, shape index: {}]
  %s5 = inlined_call_operand.hbm [shape: f32[1,256], index: 5, kind: output, shape index: {}]
  %s6 = sld [smem:[#allocation0]]
  $region65: #{tpu_custom_call.1} parent=0
    _
  %s8 = ssub.s32 1, %s6
  %s9 = scalar_select 0, %s8, %s6
  $region1: #{tpu_custom_call.1} parent=0
    #allocation2 [shape = 'u8[262144]{0}', space=vmem, size = 0x40000, scoped, tag = 'input window, operand 0']
    #allocation3 [shape = 's32[2]{0}', space=sflag, size = 0x8, scoped, tag = 'scoped memory for tpu_custom_call.1']
    #allocation4 [shape = 's32[2]{0}', space=sflag, size = 0x8, scoped, tag = 'scoped memory for tpu_custom_call.1']
    #allocation5 [shape = 'u8[262144]{0}', space=vmem, size = 0x40000, scoped, tag = 'input window, operand 1, single buffered']
    #allocation6 [shape = 's32[1]{0}', space=sflag, size = 0x4, scoped, tag = 'scoped memory for tpu_custom_call.1']
    #allocation7 [shape = 'u8[65536]{0}', space=vmem, size = 0x10000, scoped, tag = 'input window, operand 2, single buffered']
    #allocation8 [shape = 'u8[1024]{0}', space=vmem, size = 0x400, scoped, tag = 'output window, operand 0']
    %10 = vsyncpa [#allocation3], 0
    %s11 = scalar_lea.sflag [#allocation3], 1
    %12 = vsyncpa %s11, 0
    %13 = vsyncpa [#allocation6], 0
    %14 = vsyncpa [#allocation4], 0
    %s15 = scalar_lea.sflag [#allocation4], 1
    %16 = vsyncpa %s15, 0
    loop: start=0, step=1, limit=4
    $region2: #{tpu_custom_call.1} parent=1 // loop_pre_header
      _
    $region3: #{tpu_custom_call.1} parent=1 // loop_header
      %s18 = sphi 0, %s22
      %p19 = scmp.ge.s32.totalorder %s18, 4
      %s28 = sphi 0, %s30
      %s31 = sphi 0, %s28
      %s32 = sphi 0, %s31
      %s48 = sphi 0, %s32
      %s52 = sphi 0, %s52
      %s54 = sphi 0, %s52
      %s55 = sphi 0, %s54
      %s69 = sphi 0, %s55
      %s73 = sphi 0, %s73
      %s75 = sphi 0, %s73
      %s76 = sphi 0, %s75
      %s90 = sphi 0, %s76
      %s94 = sphi 0, %s94
      %s96 = sphi 0, %s94
      %s97 = sphi 0, %s96
      %s111 = sphi 0, %s97
      %s115 = sphi 0, %s115
      %s117 = sphi 0, %s115
      %s118 = sphi 0, %s117
      %s132 = sphi 0, %s118
      %s138 = sphi 0, %s140
      %s141 = sphi 0, %s138
      %s142 = sphi 0, %s141
      %s158 = sphi 0, %s142
    $region4: #{tpu_custom_call.1} parent=1 // loop_header_branch
      %21 = sbr.rel (%p19) target = $region8
    $region5: #{tpu_custom_call.1} parent=1 // loop_body
      %s23 = ssub.s32 %s18, 1
      %s24 = ssub.s32 %s18, 2
      %s25 = sadd.s32 %s18, 1
      %s26 = ssub.s32 %s18, %s25
      %p27 = scmp.eq.s32.totalorder %s26, 0
      %s29 = sadd.s32 %s28, 1
      %s30 = scalar_select %p27, %s28, %s29
      %p33 = pneg %p27
      %p34 = scmp.eq.s32.totalorder %s18, 1
      %p35 = por %p33, %p34
      %p36 = scmp.ne.s32.totalorder %s28, %s31
      %p37 = scmp.eq.s32.totalorder %s18, 0
      %p38 = por %p36, %p37
      %p39 = scmp.ne.s32.totalorder %s28, %s31
      %p40 = scmp.eq.s32.totalorder %s23, 1
      %p41 = por %p39, %p40
      %p42 = scmp.ne.s32.totalorder %s31, %s32
      %p43 = scmp.eq.s32.totalorder %s23, 0
      %p44 = por %p42, %p43
      %p45 = scmp.ne.s32.totalorder %s31, %s32
      %p46 = scmp.eq.s32.totalorder %s24, 1
      %p47 = por %p45, %p46
      %p49 = scmp.ne.s32.totalorder %s32, %s48
      %p50 = scmp.eq.s32.totalorder %s24, 0
      %p51 = por %p49, %p50
      %s53 = sadd.s32 %s52, 1
      %p56 = scmp.eq.s32.totalorder %s18, 1
      %p57 = scmp.ne.s32.totalorder %s52, %s54
      %p58 = scmp.eq.s32.totalorder %s18, 0
      %p59 = por %p57, %p58
      %p60 = scmp.ne.s32.totalorder %s52, %s54
      %p61 = scmp.eq.s32.totalorder %s23, 1
      %p62 = por %p60, %p61
      %p63 = scmp.ne.s32.totalorder %s54, %s55
      %p64 = scmp.eq.s32.totalorder %s23, 0
      %p65 = por %p63, %p64
      %p66 = scmp.ne.s32.totalorder %s54, %s55
      %p67 = scmp.eq.s32.totalorder %s24, 1
      %p68 = por %p66, %p67
      %p70 = scmp.ne.s32.totalorder %s55, %s69
      %p71 = scmp.eq.s32.totalorder %s24, 0
      %p72 = por %p70, %p71
      %s74 = sadd.s32 %s73, 1
      %p77 = scmp.eq.s32.totalorder %s18, 1
      %p78 = scmp.ne.s32.totalorder %s73, %s75
      %p79 = scmp.eq.s32.totalorder %s18, 0
      %p80 = por %p78, %p79
      %p81 = scmp.ne.s32.totalorder %s73, %s75
      %p82 = scmp.eq.s32.totalorder %s23, 1
      %p83 = por %p81, %p82
      %p84 = scmp.ne.s32.totalorder %s75, %s76
      %p85 = scmp.eq.s32.totalorder %s23, 0
      %p86 = por %p84, %p85
      %p87 = scmp.ne.s32.totalorder %s75, %s76
      %p88 = scmp.eq.s32.totalorder %s24, 1
      %p89 = por %p87, %p88
      %p91 = scmp.ne.s32.totalorder %s76, %s90
      %p92 = scmp.eq.s32.totalorder %s24, 0
      %p93 = por %p91, %p92
      %s95 = sadd.s32 %s94, 1
      %p98 = scmp.eq.s32.totalorder %s18, 1
      %p99 = scmp.ne.s32.totalorder %s94, %s96
      %p100 = scmp.eq.s32.totalorder %s18, 0
      %p101 = por %p99, %p100
      %p102 = scmp.ne.s32.totalorder %s94, %s96
      %p103 = scmp.eq.s32.totalorder %s23, 1
      %p104 = por %p102, %p103
      %p105 = scmp.ne.s32.totalorder %s96, %s97
      %p106 = scmp.eq.s32.totalorder %s23, 0
      %p107 = por %p105, %p106
      %p108 = scmp.ne.s32.totalorder %s96, %s97
      %p109 = scmp.eq.s32.totalorder %s24, 1
      %p110 = por %p108, %p109
      %p112 = scmp.ne.s32.totalorder %s97, %s111
      %p113 = scmp.eq.s32.totalorder %s24, 0
      %p114 = por %p112, %p113
      %s116 = sadd.s32 %s115, 1
      %p119 = scmp.eq.s32.totalorder %s18, 1
      %p120 = scmp.ne.s32.totalorder %s115, %s117
      %p121 = scmp.eq.s32.totalorder %s18, 0
      %p122 = por %p120, %p121
      %p123 = scmp.ne.s32.totalorder %s115, %s117
      %p124 = scmp.eq.s32.totalorder %s23, 1
      %p125 = por %p123, %p124
      %p126 = scmp.ne.s32.totalorder %s117, %s118
      %p127 = scmp.eq.s32.totalorder %s23, 0
      %p128 = por %p126, %p127
      %p129 = scmp.ne.s32.totalorder %s117, %s118
      %p130 = scmp.eq.s32.totalorder %s24, 1
      %p131 = por %p129, %p130
      %p133 = scmp.ne.s32.totalorder %s118, %s132
      %p134 = scmp.eq.s32.totalorder %s24, 0
      %p135 = por %p133, %p134
      %s136 = ssub.s32 %s18, %s25
      %p137 = scmp.eq.s32.totalorder %s136, 0
      %s139 = sadd.s32 %s138, 1
      %s140 = scalar_select %p137, %s138, %s139
      %p143 = pneg %p137
      %p144 = scmp.eq.s32.totalorder %s18, 1
      %p145 = por %p143, %p144
      %p146 = scmp.ne.s32.totalorder %s138, %s141
      %p147 = scmp.eq.s32.totalorder %s18, 0
      %p148 = por %p146, %p147
      %p149 = scmp.ne.s32.totalorder %s138, %s141
      %p150 = scmp.eq.s32.totalorder %s23, 1
      %p151 = por %p149, %p150
      %p152 = scmp.ne.s32.totalorder %s141, %s142
      %p153 = scmp.eq.s32.totalorder %s23, 0
      %p154 = por %p152, %p153
      %p155 = scmp.ne.s32.totalorder %s141, %s142
      %p156 = scmp.eq.s32.totalorder %s24, 1
      %p157 = por %p155, %p156
      %p159 = scmp.ne.s32.totalorder %s142, %s158
      %p160 = scmp.eq.s32.totalorder %s24, 0
      %p161 = por %p159, %p160
      %p162 = scmp.le.s32.totalorder 1, %s18
      %p163 = scmp.lt.s32.totalorder %s18, 3
      %p164 = pnand %p162, %p163
      %p165 = pneg %p164
      // Predicated region
      $region9: #{tpu_custom_call.1} parent=5 // pred_check
        _
      $region10: #{tpu_custom_call.1} parent=5 // pred_check_branch
        %167 = sbr.rel (%p164) target = $region12
      $region11: #{tpu_custom_call.1} parent=5 // pred_region
        %s168 = ssub.s32 %s18, 1
        // Predicated region
        $region13: #{tpu_custom_call.1} parent=11 // pred_check
          %p169 = pneg %p65
        $region14: #{tpu_custom_call.1} parent=11 // pred_check_branch
          %171 = sbr.rel (%p169) target = $region16
        $region15: #{tpu_custom_call.1} parent=11 // pred_region
          %173 = vsyncadd [#allocation6], 0
          %s174 = sshll.u32 %s1, 4
          %s175 = int_to_ptr.hbm [resolvable:$true] %s174
          %s176 = sshll.u32 [#allocation5], 4
          %s177 = int_to_ptr.vmem [resolvable:$true] %s176
          %182 = dma.hbm_to_vmem [thread:$0]  %s175, 8192, %s177, [#allocation6], 128, 128, 8
        $region16: #{tpu_custom_call.1} parent=11 // pred_fallthru
          _
        // Predicated region
        $region17: #{tpu_custom_call.1} parent=11 // pred_check
          %p183 = pneg %p86
        $region18: #{tpu_custom_call.1} parent=11 // pred_check_branch
          %185 = sbr.rel (%p183) target = $region20
        $region19: #{tpu_custom_call.1} parent=11 // pred_region
          %187 = vsyncadd [#allocation6], 0
          %s188 = sshll.u32 %s2, 4
          %s189 = int_to_ptr.hbm [resolvable:$true] %s188
          %s190 = sshll.u32 [#allocation7], 4
          %s191 = int_to_ptr.vmem [resolvable:$true] %s190
          %196 = dma.hbm_to_vmem [thread:$0]  %s189, 2048, %s191, [#allocation6], 64, 64, 4
        $region20: #{tpu_custom_call.1} parent=11 // pred_fallthru
          _
        // Predicated region
        $region21: #{tpu_custom_call.1} parent=11 // pred_check
          %p197 = pneg %p107
        $region22: #{tpu_custom_call.1} parent=11 // pred_check_branch
          %199 = sbr.rel (%p197) target = $region24
        $region23: #{tpu_custom_call.1} parent=11 // pred_region
          _
        $region24: #{tpu_custom_call.1} parent=11 // pred_fallthru
          _
        // Predicated region
        $region25: #{tpu_custom_call.1} parent=11 // pred_check
          %p200 = pneg %p128
        $region26: #{tpu_custom_call.1} parent=11 // pred_check_branch
          %202 = sbr.rel (%p200) target = $region28
        $region27: #{tpu_custom_call.1} parent=11 // pred_region
          _
        $region28: #{tpu_custom_call.1} parent=11 // pred_fallthru
          _
      $region12: #{tpu_custom_call.1} parent=5 // pred_fallthru
        _
      %p203 = scmp.lt.s32.totalorder %s18, 2
      // Predicated region
      $region29: #{tpu_custom_call.1} parent=5 // pred_check
        %p204 = pneg %p203
      $region30: #{tpu_custom_call.1} parent=5 // pred_check_branch
        %206 = sbr.rel (%p204) target = $region32
      $region31: #{tpu_custom_call.1} parent=5 // pred_region
        // Predicated region
        $region33: #{tpu_custom_call.1} parent=31 // pred_check
          %p207 = pneg %p38
        $region34: #{tpu_custom_call.1} parent=31 // pred_check_branch
          %209 = sbr.rel (%p207) target = $region36
        $region35: #{tpu_custom_call.1} parent=31 // pred_region
          %s210 = sand.u32 %s28, 1
          %s211 = scalar_lea.sflag [#allocation3], %s210
          %s212 = sand.u32 %s28, 1
          %s213 = smul.addr %s212, 256
          %s214 = scalar_lea.vmem [#allocation2], %s213
          %s215 = smul.u32 16, %s18
          %217 = vsyncadd %s211, 0
          %s218 = smul.addr %s215, 4
          %s219 = smul.addr %s218, 4
          %s220 = scalar_lea.hbm %s0, %s219
          %s221 = sshll.u32 %s220, 4
          %s222 = int_to_ptr.hbm [resolvable:$true] %s221
          %s223 = sshll.u32 %s214, 4
          %s224 = int_to_ptr.vmem [resolvable:$true] %s223
          %229 = dma.hbm_to_vmem [thread:$0]  %s222, 4096, %s224, %s211, 256, 256, 16
        $region36: #{tpu_custom_call.1} parent=31 // pred_fallthru
          _
      $region32: #{tpu_custom_call.1} parent=5 // pred_fallthru
        _
      %p230 = scmp.le.s32.totalorder 1, %s18
      %p231 = scmp.lt.s32.totalorder %s18, 3
      %p232 = pnand %p230, %p231
      %p233 = pneg %p232
      // Predicated region
      $region37: #{tpu_custom_call.1} parent=5 // pred_check
        _
      $region38: #{tpu_custom_call.1} parent=5 // pred_check_branch
        %235 = sbr.rel (%p232) target = $region40
      $region39: #{tpu_custom_call.1} parent=5 // pred_region
        %s236 = ssub.s32 %s18, 1
        %s237 = sand.u32 %s31, 1
        %s238 = scalar_lea.sflag [#allocation3], %s237
        %s239 = sand.u32 %s31, 1
        %s240 = smul.addr %s239, 256
        %s241 = scalar_lea.vmem [#allocation2], %s240
        // Predicated region
        $region41: #{tpu_custom_call.1} parent=39 // pred_check
          %p242 = pneg %p44
        $region42: #{tpu_custom_call.1} parent=39 // pred_check_branch
          %244 = sbr.rel (%p242) target = $region44
        $region43: #{tpu_custom_call.1} parent=39 // pred_region
          %246 = dma.done %s238, 4096
        $region44: #{tpu_custom_call.1} parent=39 // pred_fallthru
          _
        // Predicated region
        $region45: #{tpu_custom_call.1} parent=39 // pred_check
          %p247 = pneg %p65
        $region46: #{tpu_custom_call.1} parent=39 // pred_check_branch
          %249 = sbr.rel (%p247) target = $region48
        $region47: #{tpu_custom_call.1} parent=39 // pred_region
          %251 = dma.done [#allocation6], 8192
        $region48: #{tpu_custom_call.1} parent=39 // pred_fallthru
          _
        // Predicated region
        $region49: #{tpu_custom_call.1} parent=39 // pred_check
          %p252 = pneg %p86
        $region50: #{tpu_custom_call.1} parent=39 // pred_check_branch
          %254 = sbr.rel (%p252) target = $region52
        $region51: #{tpu_custom_call.1} parent=39 // pred_region
          %256 = dma.done [#allocation6], 2048
        $region52: #{tpu_custom_call.1} parent=39 // pred_fallthru
          _
        %s257 = sand.u32 %s31, 1
        %s258 = scalar_lea.sflag [#allocation3], %s257
        %s259 = sand.u32 %s31, 1
        %s260 = smul.addr %s259, 256
        %s261 = scalar_lea.vmem [#allocation2], %s260
        %p262 = pneg %p44
        %p263 = pneg %p41
        %p264 = pneg %p65
        %p265 = pneg %p62
        %p266 = pneg %p86
        %p267 = pneg %p83
        %p268 = pneg %p107
        %p269 = pneg %p104
        %p270 = pneg %p128
        %p271 = pneg %p125
        %p272 = pneg %p154
        %p273 = pneg %p151
        %s274 = sand.u32 %s141, 1
        %s275 = scalar_lea.sflag [#allocation4], %s274
        %s276 = sand.u32 %s141, 1
        %s277 = scalar_lea.vmem [#allocation8], %s276
        %s278 = smul.u32 16, %s23
        %v279 = vld [vmem:[%s241] sm:$0xff]
        %v280 = vld [vmem:[%s241 + $0x8] sm:$0xff]
        %v281 = vld [vmem:[%s241 + $0x10] sm:$0xff]
        %v282 = vld [vmem:[%s241 + $0x18] sm:$0xff]
        %v283 = vld [vmem:[%s241 + $0x20] sm:$0xff]
        %v284 = vld [vmem:[%s241 + $0x28] sm:$0xff]
        %v285 = vld [vmem:[%s241 + $0x30] sm:$0xff]
        %v286 = vld [vmem:[%s241 + $0x38] sm:$0xff]
        %v287 = vld [vmem:[%s241 + $0x40] sm:$0xff]
        %v288 = vld [vmem:[%s241 + $0x48] sm:$0xff]
        %v289 = vld [vmem:[%s241 + $0x50] sm:$0xff]
        %v290 = vld [vmem:[%s241 + $0x58] sm:$0xff]
        %v291 = vld [vmem:[%s241 + $0x60] sm:$0xff]
        %v292 = vld [vmem:[%s241 + $0x68] sm:$0xff]
        %v293 = vld [vmem:[%s241 + $0x70] sm:$0xff]
        %v294 = vld [vmem:[%s241 + $0x78] sm:$0xff]
        %v295 = vld [vmem:[%s241 + $0x80] sm:$0xff]
        %v296 = vld [vmem:[%s241 + $0x88] sm:$0xff]
        %v297 = vld [vmem:[%s241 + $0x90] sm:$0xff]
        %v298 = vld [vmem:[%s241 + $0x98] sm:$0xff]
        %v299 = vld [vmem:[%s241 + $0xa0] sm:$0xff]
        %v300 = vld [vmem:[%s241 + $0xa8] sm:$0xff]
        %v301 = vld [vmem:[%s241 + $0xb0] sm:$0xff]
        %v302 = vld [vmem:[%s241 + $0xb8] sm:$0xff]
        %v303 = vld [vmem:[%s241 + $0xc0] sm:$0xff]
        %v304 = vld [vmem:[%s241 + $0xc8] sm:$0xff]
        %v305 = vld [vmem:[%s241 + $0xd0] sm:$0xff]
        %v306 = vld [vmem:[%s241 + $0xd8] sm:$0xff]
        %v307 = vld [vmem:[%s241 + $0xe0] sm:$0xff]
        %v308 = vld [vmem:[%s241 + $0xe8] sm:$0xff]
        %v309 = vld [vmem:[%s241 + $0xf0] sm:$0xff]
        %v310 = vld [vmem:[%s241 + $0xf8] sm:$0xff]
        %v311 = vld [vmem:[#allocation5] sm:$0xff]
        %v312 = vld [vmem:[#allocation5 + $0x8] sm:$0xff]
        %v313 = vld [vmem:[#allocation5 + $0x10] sm:$0xff]
        %v314 = vld [vmem:[#allocation5 + $0x18] sm:$0xff]
        %v315 = vld [vmem:[#allocation5 + $0x20] sm:$0xff]
        %v316 = vld [vmem:[#allocation5 + $0x28] sm:$0xff]
        %v317 = vld [vmem:[#allocation5 + $0x30] sm:$0xff]
        %v318 = vld [vmem:[#allocation5 + $0x38] sm:$0xff]
        %v319 = vld [vmem:[#allocation5 + $0x40] sm:$0xff]
        %v320 = vld [vmem:[#allocation5 + $0x48] sm:$0xff]
        %v321 = vld [vmem:[#allocation5 + $0x50] sm:$0xff]
        %v322 = vld [vmem:[#allocation5 + $0x58] sm:$0xff]
        %v323 = vld [vmem:[#allocation5 + $0x60] sm:$0xff]
        %v324 = vld [vmem:[#allocation5 + $0x68] sm:$0xff]
        %v325 = vld [vmem:[#allocation5 + $0x70] sm:$0xff]
        %v326 = vld [vmem:[#allocation5 + $0x78] sm:$0xff]
        %v327 = vld [vmem:[#allocation5 + $0x80] sm:$0xff]
        %v328 = vld [vmem:[#allocation5 + $0x88] sm:$0xff]
        %v329 = vld [vmem:[#allocation5 + $0x90] sm:$0xff]
        %v330 = vld [vmem:[#allocation5 + $0x98] sm:$0xff]
        %v331 = vld [vmem:[#allocation5 + $0xa0] sm:$0xff]
        %v332 = vld [vmem:[#allocation5 + $0xa8] sm:$0xff]
        %v333 = vld [vmem:[#allocation5 + $0xb0] sm:$0xff]
        %v334 = vld [vmem:[#allocation5 + $0xb8] sm:$0xff]
        %v335 = vld [vmem:[#allocation5 + $0xc0] sm:$0xff]
        %v336 = vld [vmem:[#allocation5 + $0xc8] sm:$0xff]
        %v337 = vld [vmem:[#allocation5 + $0xd0] sm:$0xff]
        %v338 = vld [vmem:[#allocation5 + $0xd8] sm:$0xff]
        %v339 = vld [vmem:[#allocation5 + $0xe0] sm:$0xff]
        %v340 = vld [vmem:[#allocation5 + $0xe8] sm:$0xff]
        %v341 = vld [vmem:[#allocation5 + $0xf0] sm:$0xff]
        %v342 = vld [vmem:[#allocation5 + $0xf8] sm:$0xff]
        %v343 = vld [vmem:[#allocation5 + $0x100] sm:$0xff]
        %v344 = vld [vmem:[#allocation5 + $0x108] sm:$0xff]
        %v345 = vld [vmem:[#allocation5 + $0x110] sm:$0xff]
        %v346 = vld [vmem:[#allocation5 + $0x118] sm:$0xff]
        %v347 = vld [vmem:[#allocation5 + $0x120] sm:$0xff]
        %v348 = vld [vmem:[#allocation5 + $0x128] sm:$0xff]
        %v349 = vld [vmem:[#allocation5 + $0x130] sm:$0xff]
        %v350 = vld [vmem:[#allocation5 + $0x138] sm:$0xff]
        %v351 = vld [vmem:[#allocation5 + $0x140] sm:$0xff]
        %v352 = vld [vmem:[#allocation5 + $0x148] sm:$0xff]
        %v353 = vld [vmem:[#allocation5 + $0x150] sm:$0xff]
        %v354 = vld [vmem:[#allocation5 + $0x158] sm:$0xff]
        %v355 = vld [vmem:[#allocation5 + $0x160] sm:$0xff]
        %v356 = vld [vmem:[#allocation5 + $0x168] sm:$0xff]
        %v357 = vld [vmem:[#allocation5 + $0x170] sm:$0xff]
        %v358 = vld [vmem:[#allocation5 + $0x178] sm:$0xff]
        %v359 = vld [vmem:[#allocation5 + $0x180] sm:$0xff]
        %v360 = vld [vmem:[#allocation5 + $0x188] sm:$0xff]
        %v361 = vld [vmem:[#allocation5 + $0x190] sm:$0xff]
        %v362 = vld [vmem:[#allocation5 + $0x198] sm:$0xff]
        %v363 = vld [vmem:[#allocation5 + $0x1a0] sm:$0xff]
        %v364 = vld [vmem:[#allocation5 + $0x1a8] sm:$0xff]
        %v365 = vld [vmem:[#allocation5 + $0x1b0] sm:$0xff]
        %v366 = vld [vmem:[#allocation5 + $0x1b8] sm:$0xff]
        %v367 = vld [vmem:[#allocation5 + $0x1c0] sm:$0xff]
        %v368 = vld [vmem:[#allocation5 + $0x1c8] sm:$0xff]
        %v369 = vld [vmem:[#allocation5 + $0x1d0] sm:$0xff]
        %v370 = vld [vmem:[#allocation5 + $0x1d8] sm:$0xff]
        %v371 = vld [vmem:[#allocation5 + $0x1e0] sm:$0xff]
        %v372 = vld [vmem:[#allocation5 + $0x1e8] sm:$0xff]
        %v373 = vld [vmem:[#allocation5 + $0x1f0] sm:$0xff]
        %v374 = vld [vmem:[#allocation5 + $0x1f8] sm:$0xff]
        %v407 = vunpack.c.l.b16 %v279
        %v408 = vunpack.c.h.b16 %v279
        %v409 = vunpack.c.l.b16 %v280
        %v410 = vunpack.c.h.b16 %v280
        %v411 = vunpack.c.l.b16 %v281
        %v412 = vunpack.c.h.b16 %v281
        %v413 = vunpack.c.l.b16 %v282
        %v414 = vunpack.c.h.b16 %v282
        %v415 = vunpack.c.l.b16 %v283
        %v416 = vunpack.c.h.b16 %v283
        %v417 = vunpack.c.l.b16 %v284
        %v418 = vunpack.c.h.b16 %v284
        %v419 = vunpack.c.l.b16 %v285
        %v420 = vunpack.c.h.b16 %v285
        %v421 = vunpack.c.l.b16 %v286
        %v422 = vunpack.c.h.b16 %v286
        %v423 = vunpack.c.l.b16 %v287
        %v424 = vunpack.c.h.b16 %v287
        %v425 = vunpack.c.l.b16 %v288
        %v426 = vunpack.c.h.b16 %v288
        %v427 = vunpack.c.l.b16 %v289
        %v428 = vunpack.c.h.b16 %v289
        %v429 = vunpack.c.l.b16 %v290
        %v430 = vunpack.c.h.b16 %v290
        %v431 = vunpack.c.l.b16 %v291
        %v432 = vunpack.c.h.b16 %v291
        %v433 = vunpack.c.l.b16 %v292
        %v434 = vunpack.c.h.b16 %v292
        %v435 = vunpack.c.l.b16 %v293
        %v436 = vunpack.c.h.b16 %v293
        %v437 = vunpack.c.l.b16 %v294
        %v438 = vunpack.c.h.b16 %v294
        %v439 = vunpack.c.l.b16 %v295
        %v440 = vunpack.c.h.b16 %v295
        %v441 = vunpack.c.l.b16 %v296
        %v442 = vunpack.c.h.b16 %v296
        %v443 = vunpack.c.l.b16 %v297
        %v444 = vunpack.c.h.b16 %v297
        %v445 = vunpack.c.l.b16 %v298
        %v446 = vunpack.c.h.b16 %v298
        %v447 = vunpack.c.l.b16 %v299
        %v448 = vunpack.c.h.b16 %v299
        %v449 = vunpack.c.l.b16 %v300
        %v450 = vunpack.c.h.b16 %v300
        %v451 = vunpack.c.l.b16 %v301
        %v452 = vunpack.c.h.b16 %v301
        %v453 = vunpack.c.l.b16 %v302
        %v454 = vunpack.c.h.b16 %v302
        %v455 = vunpack.c.l.b16 %v303
        %v456 = vunpack.c.h.b16 %v303
        %v457 = vunpack.c.l.b16 %v304
        %v458 = vunpack.c.h.b16 %v304
        %v459 = vunpack.c.l.b16 %v305
        %v460 = vunpack.c.h.b16 %v305
        %v461 = vunpack.c.l.b16 %v306
        %v462 = vunpack.c.h.b16 %v306
        %v463 = vunpack.c.l.b16 %v307
        %v464 = vunpack.c.h.b16 %v307
        %v465 = vunpack.c.l.b16 %v308
        %v466 = vunpack.c.h.b16 %v308
        %v467 = vunpack.c.l.b16 %v309
        %v468 = vunpack.c.h.b16 %v309
        %v469 = vunpack.c.l.b16 %v310
        %v470 = vunpack.c.h.b16 %v310
        %v471 = vpack.c.b16 %v411, %v407
        %v472 = vpack.c.b16 %v412, %v408
        %v473 = vpack.c.b16 %v413, %v409
        %v474 = vpack.c.b16 %v414, %v410
        %v475 = vpack.c.b16 %v419, %v415
        %v476 = vpack.c.b16 %v420, %v416
        %v477 = vpack.c.b16 %v421, %v417
        %v478 = vpack.c.b16 %v422, %v418
        %v479 = vpack.c.b16 %v427, %v423
        %v480 = vpack.c.b16 %v428, %v424
        %v481 = vpack.c.b16 %v429, %v425
        %v482 = vpack.c.b16 %v430, %v426
        %v483 = vpack.c.b16 %v435, %v431
        %v484 = vpack.c.b16 %v436, %v432
        %v485 = vpack.c.b16 %v437, %v433
        %v486 = vpack.c.b16 %v438, %v434
        %v487 = vpack.c.b16 %v443, %v439
        %v488 = vpack.c.b16 %v444, %v440
        %v489 = vpack.c.b16 %v445, %v441
        %v490 = vpack.c.b16 %v446, %v442
        %v491 = vpack.c.b16 %v451, %v447
        %v492 = vpack.c.b16 %v452, %v448
        %v493 = vpack.c.b16 %v453, %v449
        %v494 = vpack.c.b16 %v454, %v450
        %v495 = vpack.c.b16 %v459, %v455
        %v496 = vpack.c.b16 %v460, %v456
        %v497 = vpack.c.b16 %v461, %v457
        %v498 = vpack.c.b16 %v462, %v458
        %v499 = vpack.c.b16 %v467, %v463
        %v500 = vpack.c.b16 %v468, %v464
        %v501 = vpack.c.b16 %v469, %v465
        %v502 = vpack.c.b16 %v470, %v466
        %v599 = vunpack.c.l.b16 %v311
        %v600 = vunpack.c.h.b16 %v311
        %v601 = vunpack.c.l.b16 %v312
        %v602 = vunpack.c.h.b16 %v312
        %v603 = vunpack.c.l.b16 %v313
        %v604 = vunpack.c.h.b16 %v313
        %v605 = vunpack.c.l.b16 %v314
        %v606 = vunpack.c.h.b16 %v314
        %v607 = vunpack.c.l.b16 %v315
        %v608 = vunpack.c.h.b16 %v315
        %v609 = vunpack.c.l.b16 %v316
        %v610 = vunpack.c.h.b16 %v316
        %v611 = vunpack.c.l.b16 %v317
        %v612 = vunpack.c.h.b16 %v317
        %v613 = vunpack.c.l.b16 %v318
        %v614 = vunpack.c.h.b16 %v318
        %v615 = vunpack.c.l.b16 %v319
        %v616 = vunpack.c.h.b16 %v319
        %v617 = vunpack.c.l.b16 %v320
        %v618 = vunpack.c.h.b16 %v320
        %v619 = vunpack.c.l.b16 %v321
        %v620 = vunpack.c.h.b16 %v321
        %v621 = vunpack.c.l.b16 %v322
        %v622 = vunpack.c.h.b16 %v322
        %v623 = vunpack.c.l.b16 %v323
        %v624 = vunpack.c.h.b16 %v323
        %v625 = vunpack.c.l.b16 %v324
        %v626 = vunpack.c.h.b16 %v324
        %v627 = vunpack.c.l.b16 %v325
        %v628 = vunpack.c.h.b16 %v325
        %v629 = vunpack.c.l.b16 %v326
        %v630 = vunpack.c.h.b16 %v326
        %v631 = vunpack.c.l.b16 %v327
        %v632 = vunpack.c.h.b16 %v327
        %v633 = vunpack.c.l.b16 %v328
        %v634 = vunpack.c.h.b16 %v328
        %v635 = vunpack.c.l.b16 %v329
        %v636 = vunpack.c.h.b16 %v329
        %v637 = vunpack.c.l.b16 %v330
        %v638 = vunpack.c.h.b16 %v330
        %v639 = vunpack.c.l.b16 %v331
        %v640 = vunpack.c.h.b16 %v331
        %v641 = vunpack.c.l.b16 %v332
        %v642 = vunpack.c.h.b16 %v332
        %v643 = vunpack.c.l.b16 %v333
        %v644 = vunpack.c.h.b16 %v333
        %v645 = vunpack.c.l.b16 %v334
        %v646 = vunpack.c.h.b16 %v334
        %v647 = vunpack.c.l.b16 %v335
        %v648 = vunpack.c.h.b16 %v335
        %v649 = vunpack.c.l.b16 %v336
        %v650 = vunpack.c.h.b16 %v336
        %v651 = vunpack.c.l.b16 %v337
        %v652 = vunpack.c.h.b16 %v337
        %v653 = vunpack.c.l.b16 %v338
        %v654 = vunpack.c.h.b16 %v338
        %v655 = vunpack.c.l.b16 %v339
        %v656 = vunpack.c.h.b16 %v339
        %v657 = vunpack.c.l.b16 %v340
        %v658 = vunpack.c.h.b16 %v340
        %v659 = vunpack.c.l.b16 %v341
        %v660 = vunpack.c.h.b16 %v341
        %v661 = vunpack.c.l.b16 %v342
        %v662 = vunpack.c.h.b16 %v342
        %v663 = vunpack.c.l.b16 %v343
        %v664 = vunpack.c.h.b16 %v343
        %v665 = vunpack.c.l.b16 %v344
        %v666 = vunpack.c.h.b16 %v344
        %v667 = vunpack.c.l.b16 %v345
        %v668 = vunpack.c.h.b16 %v345
        %v669 = vunpack.c.l.b16 %v346
        %v670 = vunpack.c.h.b16 %v346
        %v671 = vunpack.c.l.b16 %v347
        %v672 = vunpack.c.h.b16 %v347
        %v673 = vunpack.c.l.b16 %v348
        %v674 = vunpack.c.h.b16 %v348
        %v675 = vunpack.c.l.b16 %v349
        %v676 = vunpack.c.h.b16 %v349
        %v677 = vunpack.c.l.b16 %v350
        %v678 = vunpack.c.h.b16 %v350
        %v679 = vunpack.c.l.b16 %v351
        %v680 = vunpack.c.h.b16 %v351
        %v681 = vunpack.c.l.b16 %v352
        %v682 = vunpack.c.h.b16 %v352
        %v683 = vunpack.c.l.b16 %v353
        %v684 = vunpack.c.h.b16 %v353
        %v685 = vunpack.c.l.b16 %v354
        %v686 = vunpack.c.h.b16 %v354
        %v687 = vunpack.c.l.b16 %v355
        %v688 = vunpack.c.h.b16 %v355
        %v689 = vunpack.c.l.b16 %v356
        %v690 = vunpack.c.h.b16 %v356
        %v691 = vunpack.c.l.b16 %v357
        %v692 = vunpack.c.h.b16 %v357
        %v693 = vunpack.c.l.b16 %v358
        %v694 = vunpack.c.h.b16 %v358
        %v695 = vunpack.c.l.b16 %v359
        %v696 = vunpack.c.h.b16 %v359
        %v697 = vunpack.c.l.b16 %v360
        %v698 = vunpack.c.h.b16 %v360
        %v699 = vunpack.c.l.b16 %v361
        %v700 = vunpack.c.h.b16 %v361
        %v701 = vunpack.c.l.b16 %v362
        %v702 = vunpack.c.h.b16 %v362
        %v703 = vunpack.c.l.b16 %v363
        %v704 = vunpack.c.h.b16 %v363
        %v705 = vunpack.c.l.b16 %v364
        %v706 = vunpack.c.h.b16 %v364
        %v707 = vunpack.c.l.b16 %v365
        %v708 = vunpack.c.h.b16 %v365
        %v709 = vunpack.c.l.b16 %v366
        %v710 = vunpack.c.h.b16 %v366
        %v711 = vunpack.c.l.b16 %v367
        %v712 = vunpack.c.h.b16 %v367
        %v713 = vunpack.c.l.b16 %v368
        %v714 = vunpack.c.h.b16 %v368
        %v715 = vunpack.c.l.b16 %v369
        %v716 = vunpack.c.h.b16 %v369
        %v717 = vunpack.c.l.b16 %v370
        %v718 = vunpack.c.h.b16 %v370
        %v719 = vunpack.c.l.b16 %v371
        %v720 = vunpack.c.h.b16 %v371
        %v721 = vunpack.c.l.b16 %v372
        %v722 = vunpack.c.h.b16 %v372
        %v723 = vunpack.c.l.b16 %v373
        %v724 = vunpack.c.h.b16 %v373
        %v725 = vunpack.c.l.b16 %v374
        %v726 = vunpack.c.h.b16 %v374
        %v727 = vpack.c.b16 %v601, %v599
        %v728 = vpack.c.b16 %v602, %v600
        %v729 = vpack.c.b16 %v605, %v603
        %v730 = vpack.c.b16 %v606, %v604
        %v731 = vpack.c.b16 %v609, %v607
        %v732 = vpack.c.b16 %v610, %v608
        %v733 = vpack.c.b16 %v613, %v611
        %v734 = vpack.c.b16 %v614, %v612
        %v735 = vpack.c.b16 %v617, %v615
        %v736 = vpack.c.b16 %v618, %v616
        %v737 = vpack.c.b16 %v621, %v619
        %v738 = vpack.c.b16 %v622, %v620
        %v739 = vpack.c.b16 %v625, %v623
        %v740 = vpack.c.b16 %v626, %v624
        %v741 = vpack.c.b16 %v629, %v627
        %v742 = vpack.c.b16 %v630, %v628
        %v743 = vpack.c.b16 %v633, %v631
        %v744 = vpack.c.b16 %v634, %v632
        %v745 = vpack.c.b16 %v637, %v635
        %v746 = vpack.c.b16 %v638, %v636
        %v747 = vpack.c.b16 %v641, %v639
        %v748 = vpack.c.b16 %v642, %v640
        %v749 = vpack.c.b16 %v645, %v643
        %v750 = vpack.c.b16 %v646, %v644
        %v751 = vpack.c.b16 %v649, %v647
        %v752 = vpack.c.b16 %v650, %v648
        %v753 = vpack.c.b16 %v653, %v651
        %v754 = vpack.c.b16 %v654, %v652
        %v755 = vpack.c.b16 %v657, %v655
        %v756 = vpack.c.b16 %v658, %v656
        %v757 = vpack.c.b16 %v661, %v659
        %v758 = vpack.c.b16 %v662, %v660
        %v759 = vpack.c.b16 %v665, %v663
        %v760 = vpack.c.b16 %v666, %v664
        %v761 = vpack.c.b16 %v669, %v667
        %v762 = vpack.c.b16 %v670, %v668
        %v763 = vpack.c.b16 %v673, %v671
        %v764 = vpack.c.b16 %v674, %v672
        %v765 = vpack.c.b16 %v677, %v675
        %v766 = vpack.c.b16 %v678, %v676
        %v767 = vpack.c.b16 %v681, %v679
        %v768 = vpack.c.b16 %v682, %v680
        %v769 = vpack.c.b16 %v685, %v683
        %v770 = vpack.c.b16 %v686, %v684
        %v771 = vpack.c.b16 %v689, %v687
        %v772 = vpack.c.b16 %v690, %v688
        %v773 = vpack.c.b16 %v693, %v691
        %v774 = vpack.c.b16 %v694, %v692
        %v775 = vpack.c.b16 %v697, %v695
        %v776 = vpack.c.b16 %v698, %v696
        %v777 = vpack.c.b16 %v701, %v699
        %v778 = vpack.c.b16 %v702, %v700
        %v779 = vpack.c.b16 %v705, %v703
        %v780 = vpack.c.b16 %v706, %v704
        %v781 = vpack.c.b16 %v709, %v707
        %v782 = vpack.c.b16 %v710, %v708
        %v783 = vpack.c.b16 %v713, %v711
        %v784 = vpack.c.b16 %v714, %v712
        %v785 = vpack.c.b16 %v717, %v715
        %v786 = vpack.c.b16 %v718, %v716
        %v787 = vpack.c.b16 %v721, %v719
        %v788 = vpack.c.b16 %v722, %v720
        %v789 = vpack.c.b16 %v725, %v723
        %v790 = vpack.c.b16 %v726, %v724
        %855 = vmatpush.bf16.msra.mxu0 %v741
        %856 = vmatpush.bf16.msra.mxu0 %v739
        %857 = vmatpush.bf16.msra.mxu0 %v737
        %858 = vmatpush.bf16.msra.mxu0 %v735
        %859 = vmatpush.bf16.msra.mxu0 %v733
        %860 = vmatpush.bf16.msra.mxu0 %v731
        %861 = vmatpush.bf16.msra.mxu0 %v729
        %862 = vmatpush.bf16.msra.mxu0 %v727
        %863 = vmatmul.bf16.gmra.mxu0 %v471
        %v864 = vpop.f32.mrf.mxu0
        %v865 = vadd.f32 0.0, %v864
        %v866 = vpop.f32.mrf.mxu0
        %v867 = vadd.f32 0.0, %v866
        %868 = vmatmul.bf16.gmra.mxu0 %v475
        %v869 = vpop.f32.mrf.mxu0
        %v870 = vadd.f32 0.0, %v869
        %v871 = vpop.f32.mrf.mxu0
        %v872 = vadd.f32 0.0, %v871
        %873 = vmatmul.bf16.gmra.mxu0 %v479
        %v874 = vpop.f32.mrf.mxu0
        %v875 = vadd.f32 0.0, %v874
        %v876 = vpop.f32.mrf.mxu0
        %v877 = vadd.f32 0.0, %v876
        %878 = vmatmul.bf16.gmra.mxu0 %v483
        %v879 = vpop.f32.mrf.mxu0
        %v880 = vadd.f32 0.0, %v879
        %v881 = vpop.f32.mrf.mxu0
        %v882 = vadd.f32 0.0, %v881
        %883 = vmatmul.bf16.gmra.mxu0 %v487
        %v884 = vpop.f32.mrf.mxu0
        %v885 = vadd.f32 0.0, %v884
        %v886 = vpop.f32.mrf.mxu0
        %v887 = vadd.f32 0.0, %v886
        %888 = vmatmul.bf16.gmra.mxu0 %v491
        %v889 = vpop.f32.mrf.mxu0
        %v890 = vadd.f32 0.0, %v889
        %v891 = vpop.f32.mrf.mxu0
        %v892 = vadd.f32 0.0, %v891
        %893 = vmatmul.bf16.gmra.mxu0 %v495
        %v894 = vpop.f32.mrf.mxu0
        %v895 = vadd.f32 0.0, %v894
        %v896 = vpop.f32.mrf.mxu0
        %v897 = vadd.f32 0.0, %v896
        %898 = vmatmul.bf16.gmra.mxu0 %v499
        %v899 = vpop.f32.mrf.mxu0
        %v900 = vadd.f32 0.0, %v899
        %v901 = vpop.f32.mrf.mxu0
        %v902 = vadd.f32 0.0, %v901
        %903 = vdwg.mxu0
        %904 = vmatpush.bf16.msra.mxu0 %v757
        %905 = vmatpush.bf16.msra.mxu0 %v755
        %906 = vmatpush.bf16.msra.mxu0 %v753
        %907 = vmatpush.bf16.msra.mxu0 %v751
        %908 = vmatpush.bf16.msra.mxu0 %v749
        %909 = vmatpush.bf16.msra.mxu0 %v747
        %910 = vmatpush.bf16.msra.mxu0 %v745
        %911 = vmatpush.bf16.msra.mxu0 %v743
        %912 = vmatmul.bf16.gmra.mxu0 %v472
        %v913 = vpop.f32.mrf.mxu0
        %v914 = vadd.f32 %v865, %v913
        %v915 = vpop.f32.mrf.mxu0
        %v916 = vadd.f32 %v867, %v915
        %917 = vmatmul.bf16.gmra.mxu0 %v476
        %v918 = vpop.f32.mrf.mxu0
        %v919 = vadd.f32 %v870, %v918
        %v920 = vpop.f32.mrf.mxu0
        %v921 = vadd.f32 %v872, %v920
        %922 = vmatmul.bf16.gmra.mxu0 %v480
        %v923 = vpop.f32.mrf.mxu0
        %v924 = vadd.f32 %v875, %v923
        %v925 = vpop.f32.mrf.mxu0
        %v926 = vadd.f32 %v877, %v925
        %927 = vmatmul.bf16.gmra.mxu0 %v484
        %v928 = vpop.f32.mrf.mxu0
        %v929 = vadd.f32 %v880, %v928
        %v930 = vpop.f32.mrf.mxu0
        %v931 = vadd.f32 %v882, %v930
        %932 = vmatmul.bf16.gmra.mxu0 %v488
        %v933 = vpop.f32.mrf.mxu0
        %v934 = vadd.f32 %v885, %v933
        %v935 = vpop.f32.mrf.mxu0
        %v936 = vadd.f32 %v887, %v935
        %937 = vmatmul.bf16.gmra.mxu0 %v492
        %v938 = vpop.f32.mrf.mxu0
        %v939 = vadd.f32 %v890, %v938
        %v940 = vpop.f32.mrf.mxu0
        %v941 = vadd.f32 %v892, %v940
        %942 = vmatmul.bf16.gmra.mxu0 %v496
        %v943 = vpop.f32.mrf.mxu0
        %v944 = vadd.f32 %v895, %v943
        %v945 = vpop.f32.mrf.mxu0
        %v946 = vadd.f32 %v897, %v945
        %947 = vmatmul.bf16.gmra.mxu0 %v500
        %v948 = vpop.f32.mrf.mxu0
        %v949 = vadd.f32 %v900, %v948
        %v950 = vpop.f32.mrf.mxu0
        %v951 = vadd.f32 %v902, %v950
        %952 = vdwg.mxu0
        %953 = vmatpush.bf16.msra.mxu0 %v773
        %954 = vmatpush.bf16.msra.mxu0 %v771
        %955 = vmatpush.bf16.msra.mxu0 %v769
        %956 = vmatpush.bf16.msra.mxu0 %v767
        %957 = vmatpush.bf16.msra.mxu0 %v765
        %958 = vmatpush.bf16.msra.mxu0 %v763
        %959 = vmatpush.bf16.msra.mxu0 %v761
        %960 = vmatpush.bf16.msra.mxu0 %v759
        %961 = vmatmul.bf16.gmra.mxu0 %v473
        %v962 = vpop.f32.mrf.mxu0
        %v963 = vadd.f32 %v914, %v962
        %v964 = vpop.f32.mrf.mxu0
        %v965 = vadd.f32 %v916, %v964
        %966 = vmatmul.bf16.gmra.mxu0 %v477
        %v967 = vpop.f32.mrf.mxu0
        %v968 = vadd.f32 %v919, %v967
        %v969 = vpop.f32.mrf.mxu0
        %v970 = vadd.f32 %v921, %v969
        %971 = vmatmul.bf16.gmra.mxu0 %v481
        %v972 = vpop.f32.mrf.mxu0
        %v973 = vadd.f32 %v924, %v972
        %v974 = vpop.f32.mrf.mxu0
        %v975 = vadd.f32 %v926, %v974
        %976 = vmatmul.bf16.gmra.mxu0 %v485
        %v977 = vpop.f32.mrf.mxu0
        %v978 = vadd.f32 %v929, %v977
        %v979 = vpop.f32.mrf.mxu0
        %v980 = vadd.f32 %v931, %v979
        %981 = vmatmul.bf16.gmra.mxu0 %v489
        %v982 = vpop.f32.mrf.mxu0
        %v983 = vadd.f32 %v934, %v982
        %v984 = vpop.f32.mrf.mxu0
        %v985 = vadd.f32 %v936, %v984
        %986 = vmatmul.bf16.gmra.mxu0 %v493
        %v987 = vpop.f32.mrf.mxu0
        %v988 = vadd.f32 %v939, %v987
        %v989 = vpop.f32.mrf.mxu0
        %v990 = vadd.f32 %v941, %v989
        %991 = vmatmul.bf16.gmra.mxu0 %v497
        %v992 = vpop.f32.mrf.mxu0
        %v993 = vadd.f32 %v944, %v992
        %v994 = vpop.f32.mrf.mxu0
        %v995 = vadd.f32 %v946, %v994
        %996 = vmatmul.bf16.gmra.mxu0 %v501
        %v997 = vpop.f32.mrf.mxu0
        %v998 = vadd.f32 %v949, %v997
        %v999 = vpop.f32.mrf.mxu0
        %v1000 = vadd.f32 %v951, %v999
        %1001 = vdwg.mxu0
        %1002 = vmatpush.bf16.msra.mxu0 %v789
        %1003 = vmatpush.bf16.msra.mxu0 %v787
        %1004 = vmatpush.bf16.msra.mxu0 %v785
        %1005 = vmatpush.bf16.msra.mxu0 %v783
        %1006 = vmatpush.bf16.msra.mxu0 %v781
        %1007 = vmatpush.bf16.msra.mxu0 %v779
        %1008 = vmatpush.bf16.msra.mxu0 %v777
        %1009 = vmatpush.bf16.msra.mxu0 %v775
        %1010 = vmatmul.bf16.gmra.mxu0 %v474
        %v1011 = vpop.f32.mrf.mxu0
        %v1012 = vadd.f32 %v963, %v1011
        %v1013 = vpop.f32.mrf.mxu0
        %v1014 = vadd.f32 %v965, %v1013
        %1015 = vmatmul.bf16.gmra.mxu0 %v478
        %v1016 = vpop.f32.mrf.mxu0
        %v1017 = vadd.f32 %v968, %v1016
        %v1018 = vpop.f32.mrf.mxu0
        %v1019 = vadd.f32 %v970, %v1018
        %1020 = vmatmul.bf16.gmra.mxu0 %v482
        %v1021 = vpop.f32.mrf.mxu0
        %v1022 = vadd.f32 %v973, %v1021
        %v1023 = vpop.f32.mrf.mxu0
        %v1024 = vadd.f32 %v975, %v1023
        %1025 = vmatmul.bf16.gmra.mxu0 %v486
        %v1026 = vpop.f32.mrf.mxu0
        %v1027 = vadd.f32 %v978, %v1026
        %v1028 = vpop.f32.mrf.mxu0
        %v1029 = vadd.f32 %v980, %v1028
        %1030 = vmatmul.bf16.gmra.mxu0 %v490
        %v1031 = vpop.f32.mrf.mxu0
        %v1032 = vadd.f32 %v983, %v1031
        %v1033 = vpop.f32.mrf.mxu0
        %v1034 = vadd.f32 %v985, %v1033
        %1035 = vmatmul.bf16.gmra.mxu0 %v494
        %v1036 = vpop.f32.mrf.mxu0
        %v1037 = vadd.f32 %v988, %v1036
        %v1038 = vpop.f32.mrf.mxu0
        %v1039 = vadd.f32 %v990, %v1038
        %1040 = vmatmul.bf16.gmra.mxu0 %v498
        %v1041 = vpop.f32.mrf.mxu0
        %v1042 = vadd.f32 %v993, %v1041
        %v1043 = vpop.f32.mrf.mxu0
        %v1044 = vadd.f32 %v995, %v1043
        %1045 = vmatmul.bf16.gmra.mxu0 %v502
        %v1046 = vpop.f32.mrf.mxu0
        %v1047 = vadd.f32 %v998, %v1046
        %v1048 = vpop.f32.mrf.mxu0
        %v1049 = vadd.f32 %v1000, %v1048
        %1050 = vdwg.mxu0
        %1051 = vmatpush.bf16.msra.mxu0 %v742
        %1052 = vmatpush.bf16.msra.mxu0 %v740
        %1053 = vmatpush.bf16.msra.mxu0 %v738
        %1054 = vmatpush.bf16.msra.mxu0 %v736
        %1055 = vmatpush.bf16.msra.mxu0 %v734
        %1056 = vmatpush.bf16.msra.mxu0 %v732
        %1057 = vmatpush.bf16.msra.mxu0 %v730
        %1058 = vmatpush.bf16.msra.mxu0 %v728
        %1059 = vmatmul.bf16.gmra.mxu0 %v471
        %v1060 = vpop.f32.mrf.mxu0
        %v1061 = vadd.f32 0.0, %v1060
        %v1062 = vpop.f32.mrf.mxu0
        %v1063 = vadd.f32 0.0, %v1062
        %1064 = vmatmul.bf16.gmra.mxu0 %v475
        %v1065 = vpop.f32.mrf.mxu0
        %v1066 = vadd.f32 0.0, %v1065
        %v1067 = vpop.f32.mrf.mxu0
        %v1068 = vadd.f32 0.0, %v1067
        %1069 = vmatmul.bf16.gmra.mxu0 %v479
        %v1070 = vpop.f32.mrf.mxu0
        %v1071 = vadd.f32 0.0, %v1070
        %v1072 = vpop.f32.mrf.mxu0
        %v1073 = vadd.f32 0.0, %v1072
        %1074 = vmatmul.bf16.gmra.mxu0 %v483
        %v1075 = vpop.f32.mrf.mxu0
        %v1076 = vadd.f32 0.0, %v1075
        %v1077 = vpop.f32.mrf.mxu0
        %v1078 = vadd.f32 0.0, %v1077
        %1079 = vmatmul.bf16.gmra.mxu0 %v487
        %v1080 = vpop.f32.mrf.mxu0
        %v1081 = vadd.f32 0.0, %v1080
        %v1082 = vpop.f32.mrf.mxu0
        %v1083 = vadd.f32 0.0, %v1082
        %1084 = vmatmul.bf16.gmra.mxu0 %v491
        %v1085 = vpop.f32.mrf.mxu0
        %v1086 = vadd.f32 0.0, %v1085
        %v1087 = vpop.f32.mrf.mxu0
        %v1088 = vadd.f32 0.0, %v1087
        %1089 = vmatmul.bf16.gmra.mxu0 %v495
        %v1090 = vpop.f32.mrf.mxu0
        %v1091 = vadd.f32 0.0, %v1090
        %v1092 = vpop.f32.mrf.mxu0
        %v1093 = vadd.f32 0.0, %v1092
        %1094 = vmatmul.bf16.gmra.mxu0 %v499
        %v1095 = vpop.f32.mrf.mxu0
        %v1096 = vadd.f32 0.0, %v1095
        %v1097 = vpop.f32.mrf.mxu0
        %v1098 = vadd.f32 0.0, %v1097
        %1099 = vdwg.mxu0
        %1100 = vmatpush.bf16.msra.mxu0 %v758
        %1101 = vmatpush.bf16.msra.mxu0 %v756
        %1102 = vmatpush.bf16.msra.mxu0 %v754
        %1103 = vmatpush.bf16.msra.mxu0 %v752
        %1104 = vmatpush.bf16.msra.mxu0 %v750
        %1105 = vmatpush.bf16.msra.mxu0 %v748
        %1106 = vmatpush.bf16.msra.mxu0 %v746
        %1107 = vmatpush.bf16.msra.mxu0 %v744
        %1108 = vmatmul.bf16.gmra.mxu0 %v472
        %v1109 = vpop.f32.mrf.mxu0
        %v1110 = vadd.f32 %v1061, %v1109
        %v1111 = vpop.f32.mrf.mxu0
        %v1112 = vadd.f32 %v1063, %v1111
        %1113 = vmatmul.bf16.gmra.mxu0 %v476
        %v1114 = vpop.f32.mrf.mxu0
        %v1115 = vadd.f32 %v1066, %v1114
        %v1116 = vpop.f32.mrf.mxu0
        %v1117 = vadd.f32 %v1068, %v1116
        %1118 = vmatmul.bf16.gmra.mxu0 %v480
        %v1119 = vpop.f32.mrf.mxu0
        %v1120 = vadd.f32 %v1071, %v1119
        %v1121 = vpop.f32.mrf.mxu0
        %v1122 = vadd.f32 %v1073, %v1121
        %1123 = vmatmul.bf16.gmra.mxu0 %v484
        %v1124 = vpop.f32.mrf.mxu0
        %v1125 = vadd.f32 %v1076, %v1124
        %v1126 = vpop.f32.mrf.mxu0
        %v1127 = vadd.f32 %v1078, %v1126
        %1128 = vmatmul.bf16.gmra.mxu0 %v488
        %v1129 = vpop.f32.mrf.mxu0
        %v1130 = vadd.f32 %v1081, %v1129
        %v1131 = vpop.f32.mrf.mxu0
        %v1132 = vadd.f32 %v1083, %v1131
        %1133 = vmatmul.bf16.gmra.mxu0 %v492
        %v1134 = vpop.f32.mrf.mxu0
        %v1135 = vadd.f32 %v1086, %v1134
        %v1136 = vpop.f32.mrf.mxu0
        %v1137 = vadd.f32 %v1088, %v1136
        %1138 = vmatmul.bf16.gmra.mxu0 %v496
        %v1139 = vpop.f32.mrf.mxu0
        %v1140 = vadd.f32 %v1091, %v1139
        %v1141 = vpop.f32.mrf.mxu0
        %v1142 = vadd.f32 %v1093, %v1141
        %1143 = vmatmul.bf16.gmra.mxu0 %v500
        %v1144 = vpop.f32.mrf.mxu0
        %v1145 = vadd.f32 %v1096, %v1144
        %v1146 = vpop.f32.mrf.mxu0
        %v1147 = vadd.f32 %v1098, %v1146
        %1148 = vdwg.mxu0
        %1149 = vmatpush.bf16.msra.mxu0 %v774
        %1150 = vmatpush.bf16.msra.mxu0 %v772
        %1151 = vmatpush.bf16.msra.mxu0 %v770
        %1152 = vmatpush.bf16.msra.mxu0 %v768
        %1153 = vmatpush.bf16.msra.mxu0 %v766
        %1154 = vmatpush.bf16.msra.mxu0 %v764
        %1155 = vmatpush.bf16.msra.mxu0 %v762
        %1156 = vmatpush.bf16.msra.mxu0 %v760
        %1157 = vmatmul.bf16.gmra.mxu0 %v473
        %v1158 = vpop.f32.mrf.mxu0
        %v1159 = vadd.f32 %v1110, %v1158
        %v1160 = vpop.f32.mrf.mxu0
        %v1161 = vadd.f32 %v1112, %v1160
        %1162 = vmatmul.bf16.gmra.mxu0 %v477
        %v1163 = vpop.f32.mrf.mxu0
        %v1164 = vadd.f32 %v1115, %v1163
        %v1165 = vpop.f32.mrf.mxu0
        %v1166 = vadd.f32 %v1117, %v1165
        %1167 = vmatmul.bf16.gmra.mxu0 %v481
        %v1168 = vpop.f32.mrf.mxu0
        %v1169 = vadd.f32 %v1120, %v1168
        %v1170 = vpop.f32.mrf.mxu0
        %v1171 = vadd.f32 %v1122, %v1170
        %1172 = vmatmul.bf16.gmra.mxu0 %v485
        %v1173 = vpop.f32.mrf.mxu0
        %v1174 = vadd.f32 %v1125, %v1173
        %v1175 = vpop.f32.mrf.mxu0
        %v1176 = vadd.f32 %v1127, %v1175
        %1177 = vmatmul.bf16.gmra.mxu0 %v489
        %v1178 = vpop.f32.mrf.mxu0
        %v1179 = vadd.f32 %v1130, %v1178
        %v1180 = vpop.f32.mrf.mxu0
        %v1181 = vadd.f32 %v1132, %v1180
        %1182 = vmatmul.bf16.gmra.mxu0 %v493
        %v1183 = vpop.f32.mrf.mxu0
        %v1184 = vadd.f32 %v1135, %v1183
        %v1185 = vpop.f32.mrf.mxu0
        %v1186 = vadd.f32 %v1137, %v1185
        %1187 = vmatmul.bf16.gmra.mxu0 %v497
        %v1188 = vpop.f32.mrf.mxu0
        %v1189 = vadd.f32 %v1140, %v1188
        %v1190 = vpop.f32.mrf.mxu0
        %v1191 = vadd.f32 %v1142, %v1190
        %1192 = vmatmul.bf16.gmra.mxu0 %v501
        %v1193 = vpop.f32.mrf.mxu0
        %v1194 = vadd.f32 %v1145, %v1193
        %v1195 = vpop.f32.mrf.mxu0
        %v1196 = vadd.f32 %v1147, %v1195
        %1197 = vdwg.mxu0
        %1198 = vmatpush.bf16.msra.mxu0 %v790
        %1199 = vmatpush.bf16.msra.mxu0 %v788
        %1200 = vmatpush.bf16.msra.mxu0 %v786
        %1201 = vmatpush.bf16.msra.mxu0 %v784
        %1202 = vmatpush.bf16.msra.mxu0 %v782
        %1203 = vmatpush.bf16.msra.mxu0 %v780
        %1204 = vmatpush.bf16.msra.mxu0 %v778
        %1205 = vmatpush.bf16.msra.mxu0 %v776
        %1206 = vmatmul.bf16.gmra.mxu0 %v474
        %v1207 = vpop.f32.mrf.mxu0
        %v1208 = vadd.f32 %v1159, %v1207
        %v1209 = vpop.f32.mrf.mxu0
        %v1210 = vadd.f32 %v1161, %v1209
        %1211 = vmatmul.bf16.gmra.mxu0 %v478
        %v1212 = vpop.f32.mrf.mxu0
        %v1213 = vadd.f32 %v1164, %v1212
        %v1214 = vpop.f32.mrf.mxu0
        %v1215 = vadd.f32 %v1166, %v1214
        %1216 = vmatmul.bf16.gmra.mxu0 %v482
        %v1217 = vpop.f32.mrf.mxu0
        %v1218 = vadd.f32 %v1169, %v1217
        %v1219 = vpop.f32.mrf.mxu0
        %v1220 = vadd.f32 %v1171, %v1219
        %1221 = vmatmul.bf16.gmra.mxu0 %v486
        %v1222 = vpop.f32.mrf.mxu0
        %v1223 = vadd.f32 %v1174, %v1222
        %v1224 = vpop.f32.mrf.mxu0
        %v1225 = vadd.f32 %v1176, %v1224
        %1226 = vmatmul.bf16.gmra.mxu0 %v490
        %v1227 = vpop.f32.mrf.mxu0
        %v1228 = vadd.f32 %v1179, %v1227
        %v1229 = vpop.f32.mrf.mxu0
        %v1230 = vadd.f32 %v1181, %v1229
        %1231 = vmatmul.bf16.gmra.mxu0 %v494
        %v1232 = vpop.f32.mrf.mxu0
        %v1233 = vadd.f32 %v1184, %v1232
        %v1234 = vpop.f32.mrf.mxu0
        %v1235 = vadd.f32 %v1186, %v1234
        %1236 = vmatmul.bf16.gmra.mxu0 %v498
        %v1237 = vpop.f32.mrf.mxu0
        %v1238 = vadd.f32 %v1189, %v1237
        %v1239 = vpop.f32.mrf.mxu0
        %v1240 = vadd.f32 %v1191, %v1239
        %1241 = vmatmul.bf16.gmra.mxu0 %v502
        %v1242 = vpop.f32.mrf.mxu0
        %v1243 = vadd.f32 %v1194, %v1242
        %v1244 = vpop.f32.mrf.mxu0
        %v1245 = vadd.f32 %v1196, %v1244
        %1246 = vdwg.mxu0
        %v1247 = vmax.f32 %v1012, 0.0
        %v1248 = vmax.f32 %v1208, 0.0
        %v1249 = vmax.f32 %v1014, 0.0
        %v1250 = vmax.f32 %v1210, 0.0
        %v1251 = vmax.f32 %v1017, 0.0
        %v1252 = vmax.f32 %v1213, 0.0
        %v1253 = vmax.f32 %v1019, 0.0
        %v1254 = vmax.f32 %v1215, 0.0
        %v1255 = vmax.f32 %v1022, 0.0
        %v1256 = vmax.f32 %v1218, 0.0
        %v1257 = vmax.f32 %v1024, 0.0
        %v1258 = vmax.f32 %v1220, 0.0
        %v1259 = vmax.f32 %v1027, 0.0
        %v1260 = vmax.f32 %v1223, 0.0
        %v1261 = vmax.f32 %v1029, 0.0
        %v1262 = vmax.f32 %v1225, 0.0
        %v1263 = vmax.f32 %v1032, 0.0
        %v1264 = vmax.f32 %v1228, 0.0
        %v1265 = vmax.f32 %v1034, 0.0
        %v1266 = vmax.f32 %v1230, 0.0
        %v1267 = vmax.f32 %v1037, 0.0
        %v1268 = vmax.f32 %v1233, 0.0
        %v1269 = vmax.f32 %v1039, 0.0
        %v1270 = vmax.f32 %v1235, 0.0
        %v1271 = vmax.f32 %v1042, 0.0
        %v1272 = vmax.f32 %v1238, 0.0
        %v1273 = vmax.f32 %v1044, 0.0
        %v1274 = vmax.f32 %v1240, 0.0
        %v1275 = vmax.f32 %v1047, 0.0
        %v1276 = vmax.f32 %v1243, 0.0
        %v1277 = vmax.f32 %v1049, 0.0
        %v1278 = vmax.f32 %v1245, 0.0
        %v1279 = vpack.c.bf16 %v1249, %v1247
        %v1280 = vpack.c.bf16 %v1250, %v1248
        %v1281 = vpack.c.bf16 %v1253, %v1251
        %v1282 = vpack.c.bf16 %v1254, %v1252
        %v1283 = vpack.c.bf16 %v1257, %v1255
        %v1284 = vpack.c.bf16 %v1258, %v1256
        %v1285 = vpack.c.bf16 %v1261, %v1259
        %v1286 = vpack.c.bf16 %v1262, %v1260
        %v1287 = vpack.c.bf16 %v1265, %v1263
        %v1288 = vpack.c.bf16 %v1266, %v1264
        %v1289 = vpack.c.bf16 %v1269, %v1267
        %v1290 = vpack.c.bf16 %v1270, %v1268
        %v1291 = vpack.c.bf16 %v1273, %v1271
        %v1292 = vpack.c.bf16 %v1274, %v1272
        %v1293 = vpack.c.bf16 %v1277, %v1275
        %v1294 = vpack.c.bf16 %v1278, %v1276
        %v1295 = vld [vmem:[#allocation7] sm:$0xf]
        %v1296 = vld [vmem:[#allocation7 + $0x4] sm:$0xf]
        %v1297 = vld [vmem:[#allocation7 + $0x8] sm:$0xf]
        %v1298 = vld [vmem:[#allocation7 + $0xc] sm:$0xf]
        %v1299 = vld [vmem:[#allocation7 + $0x10] sm:$0xf]
        %v1300 = vld [vmem:[#allocation7 + $0x14] sm:$0xf]
        %v1301 = vld [vmem:[#allocation7 + $0x18] sm:$0xf]
        %v1302 = vld [vmem:[#allocation7 + $0x1c] sm:$0xf]
        %v1303 = vld [vmem:[#allocation7 + $0x20] sm:$0xf]
        %v1304 = vld [vmem:[#allocation7 + $0x24] sm:$0xf]
        %v1305 = vld [vmem:[#allocation7 + $0x28] sm:$0xf]
        %v1306 = vld [vmem:[#allocation7 + $0x2c] sm:$0xf]
        %v1307 = vld [vmem:[#allocation7 + $0x30] sm:$0xf]
        %v1308 = vld [vmem:[#allocation7 + $0x34] sm:$0xf]
        %v1309 = vld [vmem:[#allocation7 + $0x38] sm:$0xf]
        %v1310 = vld [vmem:[#allocation7 + $0x3c] sm:$0xf]
        %v1311 = vld [vmem:[#allocation7 + $0x40] sm:$0xf]
        %v1312 = vld [vmem:[#allocation7 + $0x44] sm:$0xf]
        %v1313 = vld [vmem:[#allocation7 + $0x48] sm:$0xf]
        %v1314 = vld [vmem:[#allocation7 + $0x4c] sm:$0xf]
        %v1315 = vld [vmem:[#allocation7 + $0x50] sm:$0xf]
        %v1316 = vld [vmem:[#allocation7 + $0x54] sm:$0xf]
        %v1317 = vld [vmem:[#allocation7 + $0x58] sm:$0xf]
        %v1318 = vld [vmem:[#allocation7 + $0x5c] sm:$0xf]
        %v1319 = vld [vmem:[#allocation7 + $0x60] sm:$0xf]
        %v1320 = vld [vmem:[#allocation7 + $0x64] sm:$0xf]
        %v1321 = vld [vmem:[#allocation7 + $0x68] sm:$0xf]
        %v1322 = vld [vmem:[#allocation7 + $0x6c] sm:$0xf]
        %v1323 = vld [vmem:[#allocation7 + $0x70] sm:$0xf]
        %v1324 = vld [vmem:[#allocation7 + $0x74] sm:$0xf]
        %v1325 = vld [vmem:[#allocation7 + $0x78] sm:$0xf]
        %v1326 = vld [vmem:[#allocation7 + $0x7c] sm:$0xf]
        %v1359 = vunpack.c.l.b16 %v1295
        %v1360 = vunpack.c.l.b16 %v1296
        %v1361 = vunpack.c.l.b16 %v1297
        %v1362 = vunpack.c.l.b16 %v1298
        %v1363 = vunpack.c.l.b16 %v1299
        %v1364 = vunpack.c.l.b16 %v1300
        %v1365 = vunpack.c.l.b16 %v1301
        %v1366 = vunpack.c.l.b16 %v1302
        %v1367 = vunpack.c.l.b16 %v1303
        %v1368 = vunpack.c.l.b16 %v1304
        %v1369 = vunpack.c.l.b16 %v1305
        %v1370 = vunpack.c.l.b16 %v1306
        %v1371 = vunpack.c.l.b16 %v1307
        %v1372 = vunpack.c.l.b16 %v1308
        %v1373 = vunpack.c.l.b16 %v1309
        %v1374 = vunpack.c.l.b16 %v1310
        %v1375 = vunpack.c.l.b16 %v1311
        %v1376 = vunpack.c.l.b16 %v1312
        %v1377 = vunpack.c.l.b16 %v1313
        %v1378 = vunpack.c.l.b16 %v1314
        %v1379 = vunpack.c.l.b16 %v1315
        %v1380 = vunpack.c.l.b16 %v1316
        %v1381 = vunpack.c.l.b16 %v1317
        %v1382 = vunpack.c.l.b16 %v1318
        %v1383 = vunpack.c.l.b16 %v1319
        %v1384 = vunpack.c.l.b16 %v1320
        %v1385 = vunpack.c.l.b16 %v1321
        %v1386 = vunpack.c.l.b16 %v1322
        %v1387 = vunpack.c.l.b16 %v1323
        %v1388 = vunpack.c.l.b16 %v1324
        %v1389 = vunpack.c.l.b16 %v1325
        %v1390 = vunpack.c.l.b16 %v1326
        %v1391 = vpack.c.b16 %v1360, %v1359
        %v1392 = vpack.c.b16 %v1362, %v1361
        %v1393 = vpack.c.b16 %v1364, %v1363
        %v1394 = vpack.c.b16 %v1366, %v1365
        %v1395 = vpack.c.b16 %v1368, %v1367
        %v1396 = vpack.c.b16 %v1370, %v1369
        %v1397 = vpack.c.b16 %v1372, %v1371
        %v1398 = vpack.c.b16 %v1374, %v1373
        %v1399 = vpack.c.b16 %v1376, %v1375
        %v1400 = vpack.c.b16 %v1378, %v1377
        %v1401 = vpack.c.b16 %v1380, %v1379
        %v1402 = vpack.c.b16 %v1382, %v1381
        %v1403 = vpack.c.b16 %v1384, %v1383
        %v1404 = vpack.c.b16 %v1386, %v1385
        %v1405 = vpack.c.b16 %v1388, %v1387
        %v1406 = vpack.c.b16 %v1390, %v1389
        %1423 = vmatpush.bf16.msra.mxu0 %v1398
        %1424 = vmatpush.bf16.msra.mxu0 %v1397
        %1425 = vmatpush.bf16.msra.mxu0 %v1396
        %1426 = vmatpush.bf16.msra.mxu0 %v1395
        %1427 = vmatpush.bf16.msra.mxu0 %v1394
        %1428 = vmatpush.bf16.msra.mxu0 %v1393
        %1429 = vmatpush.bf16.msra.mxu0 %v1392
        %1430 = vmatpush.bf16.msra.mxu0 %v1391
        %1431 = vmatmul.bf16.gmra.mxu0 %v1279
        %v1432 = vpop.f32.mrf.mxu0
        %v1433 = vadd.f32 0.0, %v1432
        %v1434 = vpop.f32.mrf.mxu0
        %v1435 = vadd.f32 0.0, %v1434
        %1436 = vmatmul.bf16.gmra.mxu0 %v1281
        %v1437 = vpop.f32.mrf.mxu0
        %v1438 = vadd.f32 0.0, %v1437
        %v1439 = vpop.f32.mrf.mxu0
        %v1440 = vadd.f32 0.0, %v1439
        %1441 = vmatmul.bf16.gmra.mxu0 %v1283
        %v1442 = vpop.f32.mrf.mxu0
        %v1443 = vadd.f32 0.0, %v1442
        %v1444 = vpop.f32.mrf.mxu0
        %v1445 = vadd.f32 0.0, %v1444
        %1446 = vmatmul.bf16.gmra.mxu0 %v1285
        %v1447 = vpop.f32.mrf.mxu0
        %v1448 = vadd.f32 0.0, %v1447
        %v1449 = vpop.f32.mrf.mxu0
        %v1450 = vadd.f32 0.0, %v1449
        %1451 = vmatmul.bf16.gmra.mxu0 %v1287
        %v1452 = vpop.f32.mrf.mxu0
        %v1453 = vadd.f32 0.0, %v1452
        %v1454 = vpop.f32.mrf.mxu0
        %v1455 = vadd.f32 0.0, %v1454
        %1456 = vmatmul.bf16.gmra.mxu0 %v1289
        %v1457 = vpop.f32.mrf.mxu0
        %v1458 = vadd.f32 0.0, %v1457
        %v1459 = vpop.f32.mrf.mxu0
        %v1460 = vadd.f32 0.0, %v1459
        %1461 = vmatmul.bf16.gmra.mxu0 %v1291
        %v1462 = vpop.f32.mrf.mxu0
        %v1463 = vadd.f32 0.0, %v1462
        %v1464 = vpop.f32.mrf.mxu0
        %v1465 = vadd.f32 0.0, %v1464
        %1466 = vmatmul.bf16.gmra.mxu0 %v1293
        %v1467 = vpop.f32.mrf.mxu0
        %v1468 = vadd.f32 0.0, %v1467
        %v1469 = vpop.f32.mrf.mxu0
        %v1470 = vadd.f32 0.0, %v1469
        %1471 = vdwg.mxu0
        %1472 = vmatpush.bf16.msra.mxu0 %v1406
        %1473 = vmatpush.bf16.msra.mxu0 %v1405
        %1474 = vmatpush.bf16.msra.mxu0 %v1404
        %1475 = vmatpush.bf16.msra.mxu0 %v1403
        %1476 = vmatpush.bf16.msra.mxu0 %v1402
        %1477 = vmatpush.bf16.msra.mxu0 %v1401
        %1478 = vmatpush.bf16.msra.mxu0 %v1400
        %1479 = vmatpush.bf16.msra.mxu0 %v1399
        %1480 = vmatmul.bf16.gmra.mxu0 %v1280
        %v1481 = vpop.f32.mrf.mxu0
        %v1482 = vadd.f32 %v1433, %v1481
        %v1483 = vpop.f32.mrf.mxu0
        %v1484 = vadd.f32 %v1435, %v1483
        %1485 = vmatmul.bf16.gmra.mxu0 %v1282
        %v1486 = vpop.f32.mrf.mxu0
        %v1487 = vadd.f32 %v1438, %v1486
        %v1488 = vpop.f32.mrf.mxu0
        %v1489 = vadd.f32 %v1440, %v1488
        %1490 = vmatmul.bf16.gmra.mxu0 %v1284
        %v1491 = vpop.f32.mrf.mxu0
        %v1492 = vadd.f32 %v1443, %v1491
        %v1493 = vpop.f32.mrf.mxu0
        %v1494 = vadd.f32 %v1445, %v1493
        %1495 = vmatmul.bf16.gmra.mxu0 %v1286
        %v1496 = vpop.f32.mrf.mxu0
        %v1497 = vadd.f32 %v1448, %v1496
        %v1498 = vpop.f32.mrf.mxu0
        %v1499 = vadd.f32 %v1450, %v1498
        %1500 = vmatmul.bf16.gmra.mxu0 %v1288
        %v1501 = vpop.f32.mrf.mxu0
        %v1502 = vadd.f32 %v1453, %v1501
        %v1503 = vpop.f32.mrf.mxu0
        %v1504 = vadd.f32 %v1455, %v1503
        %1505 = vmatmul.bf16.gmra.mxu0 %v1290
        %v1506 = vpop.f32.mrf.mxu0
        %v1507 = vadd.f32 %v1458, %v1506
        %v1508 = vpop.f32.mrf.mxu0
        %v1509 = vadd.f32 %v1460, %v1508
        %1510 = vmatmul.bf16.gmra.mxu0 %v1292
        %v1511 = vpop.f32.mrf.mxu0
        %v1512 = vadd.f32 %v1463, %v1511
        %v1513 = vpop.f32.mrf.mxu0
        %v1514 = vadd.f32 %v1465, %v1513
        %1515 = vmatmul.bf16.gmra.mxu0 %v1294
        %v1516 = vpop.f32.mrf.mxu0
        %v1517 = vadd.f32 %v1468, %v1516
        %v1518 = vpop.f32.mrf.mxu0
        %v1519 = vadd.f32 %v1470, %v1518
        %1520 = vdwg.mxu0
        %v1521 = vmax.f32 %v1482, 0.0
        %v1522 = vmax.f32 %v1484, 0.0
        %v1523 = vmax.f32 %v1487, 0.0
        %v1524 = vmax.f32 %v1489, 0.0
        %v1525 = vmax.f32 %v1492, 0.0
        %v1526 = vmax.f32 %v1494, 0.0
        %v1527 = vmax.f32 %v1497, 0.0
        %v1528 = vmax.f32 %v1499, 0.0
        %v1529 = vmax.f32 %v1502, 0.0
        %v1530 = vmax.f32 %v1504, 0.0
        %v1531 = vmax.f32 %v1507, 0.0
        %v1532 = vmax.f32 %v1509, 0.0
        %v1533 = vmax.f32 %v1512, 0.0
        %v1534 = vmax.f32 %v1514, 0.0
        %v1535 = vmax.f32 %v1517, 0.0
        %v1536 = vmax.f32 %v1519, 0.0
        %v1537 = vpack.c.bf16 %v1522, %v1521
        %v1538 = vpack.c.bf16 %v1524, %v1523
        %v1539 = vpack.c.bf16 %v1526, %v1525
        %v1540 = vpack.c.bf16 %v1528, %v1527
        %v1541 = vpack.c.bf16 %v1530, %v1529
        %v1542 = vpack.c.bf16 %v1532, %v1531
        %v1543 = vpack.c.bf16 %v1534, %v1533
        %v1544 = vpack.c.bf16 %v1536, %v1535
        %v1545 = vld [vmem:[%s3] sm:$0xf]
        %v1546 = vld [vmem:[%s3 + $0x4] sm:$0xf]
        %v1547 = vld [vmem:[%s3 + $0x8] sm:$0xf]
        %v1548 = vld [vmem:[%s3 + $0xc] sm:$0xf]
        %v1549 = vld [vmem:[%s3 + $0x10] sm:$0xf]
        %v1550 = vld [vmem:[%s3 + $0x14] sm:$0xf]
        %v1551 = vld [vmem:[%s3 + $0x18] sm:$0xf]
        %v1552 = vld [vmem:[%s3 + $0x1c] sm:$0xf]
        %v1553 = vld [vmem:[%s3 + $0x20] sm:$0xf]
        %v1554 = vld [vmem:[%s3 + $0x24] sm:$0xf]
        %v1555 = vld [vmem:[%s3 + $0x28] sm:$0xf]
        %v1556 = vld [vmem:[%s3 + $0x2c] sm:$0xf]
        %v1557 = vld [vmem:[%s3 + $0x30] sm:$0xf]
        %v1558 = vld [vmem:[%s3 + $0x34] sm:$0xf]
        %v1559 = vld [vmem:[%s3 + $0x38] sm:$0xf]
        %v1560 = vld [vmem:[%s3 + $0x3c] sm:$0xf]
        %v1577 = vunpack.c.l.b16 %v1545
        %v1578 = vunpack.c.l.b16 %v1546
        %v1579 = vunpack.c.l.b16 %v1547
        %v1580 = vunpack.c.l.b16 %v1548
        %v1581 = vunpack.c.l.b16 %v1549
        %v1582 = vunpack.c.l.b16 %v1550
        %v1583 = vunpack.c.l.b16 %v1551
        %v1584 = vunpack.c.l.b16 %v1552
        %v1585 = vunpack.c.l.b16 %v1553
        %v1586 = vunpack.c.l.b16 %v1554
        %v1587 = vunpack.c.l.b16 %v1555
        %v1588 = vunpack.c.l.b16 %v1556
        %v1589 = vunpack.c.l.b16 %v1557
        %v1590 = vunpack.c.l.b16 %v1558
        %v1591 = vunpack.c.l.b16 %v1559
        %v1592 = vunpack.c.l.b16 %v1560
        %v1593 = vpack.c.b16 %v1578, %v1577
        %v1594 = vpack.c.b16 %v1580, %v1579
        %v1595 = vpack.c.b16 %v1582, %v1581
        %v1596 = vpack.c.b16 %v1584, %v1583
        %v1597 = vpack.c.b16 %v1586, %v1585
        %v1598 = vpack.c.b16 %v1588, %v1587
        %v1599 = vpack.c.b16 %v1590, %v1589
        %v1600 = vpack.c.b16 %v1592, %v1591
        %1609 = vmatpush.bf16.msra.mxu0 %v1600
        %1610 = vmatpush.bf16.msra.mxu0 %v1599
        %1611 = vmatpush.bf16.msra.mxu0 %v1598
        %1612 = vmatpush.bf16.msra.mxu0 %v1597
        %1613 = vmatpush.bf16.msra.mxu0 %v1596
        %1614 = vmatpush.bf16.msra.mxu0 %v1595
        %1615 = vmatpush.bf16.msra.mxu0 %v1594
        %1616 = vmatpush.bf16.msra.mxu0 %v1593
        %1617 = vmatmul.bf16.gmra.mxu0 %v1537
        %v1618 = vpop.f32.mrf.mxu0
        %v1619 = vadd.f32 0.0, %v1618
        %v1620 = vpop.f32.mrf.mxu0
        %v1621 = vadd.f32 0.0, %v1620
        %1622 = vmatmul.bf16.gmra.mxu0 %v1538
        %v1623 = vpop.f32.mrf.mxu0
        %v1624 = vadd.f32 0.0, %v1623
        %v1625 = vpop.f32.mrf.mxu0
        %v1626 = vadd.f32 0.0, %v1625
        %1627 = vmatmul.bf16.gmra.mxu0 %v1539
        %v1628 = vpop.f32.mrf.mxu0
        %v1629 = vadd.f32 0.0, %v1628
        %v1630 = vpop.f32.mrf.mxu0
        %v1631 = vadd.f32 0.0, %v1630
        %1632 = vmatmul.bf16.gmra.mxu0 %v1540
        %v1633 = vpop.f32.mrf.mxu0
        %v1634 = vadd.f32 0.0, %v1633
        %v1635 = vpop.f32.mrf.mxu0
        %v1636 = vadd.f32 0.0, %v1635
        %1637 = vmatmul.bf16.gmra.mxu0 %v1541
        %v1638 = vpop.f32.mrf.mxu0
        %v1639 = vadd.f32 0.0, %v1638
        %v1640 = vpop.f32.mrf.mxu0
        %v1641 = vadd.f32 0.0, %v1640
        %1642 = vmatmul.bf16.gmra.mxu0 %v1542
        %v1643 = vpop.f32.mrf.mxu0
        %v1644 = vadd.f32 0.0, %v1643
        %v1645 = vpop.f32.mrf.mxu0
        %v1646 = vadd.f32 0.0, %v1645
        %1647 = vmatmul.bf16.gmra.mxu0 %v1543
        %v1648 = vpop.f32.mrf.mxu0
        %v1649 = vadd.f32 0.0, %v1648
        %v1650 = vpop.f32.mrf.mxu0
        %v1651 = vadd.f32 0.0, %v1650
        %1652 = vmatmul.bf16.gmra.mxu0 %v1544
        %v1653 = vpop.f32.mrf.mxu0
        %v1654 = vadd.f32 0.0, %v1653
        %v1655 = vpop.f32.mrf.mxu0
        %v1656 = vadd.f32 0.0, %v1655
        %1657 = vdwg.mxu0
        %v1658 = vmax.f32 %v1619, 0.0
        %v1659 = vmax.f32 %v1621, 0.0
        %v1660 = vmax.f32 %v1624, 0.0
        %v1661 = vmax.f32 %v1626, 0.0
        %v1662 = vmax.f32 %v1629, 0.0
        %v1663 = vmax.f32 %v1631, 0.0
        %v1664 = vmax.f32 %v1634, 0.0
        %v1665 = vmax.f32 %v1636, 0.0
        %v1666 = vmax.f32 %v1639, 0.0
        %v1667 = vmax.f32 %v1641, 0.0
        %v1668 = vmax.f32 %v1644, 0.0
        %v1669 = vmax.f32 %v1646, 0.0
        %v1670 = vmax.f32 %v1649, 0.0
        %v1671 = vmax.f32 %v1651, 0.0
        %v1672 = vmax.f32 %v1654, 0.0
        %v1673 = vmax.f32 %v1656, 0.0
        %v1674 = vld [vmem:[%s4] sm:$0x1]
        %v1676 = vperm.slane %v1674, 0
        %v1678 = vmul.f32 %v1658, %v1676
        %v1679 = vmul.f32 %v1659, %v1676
        %v1680 = vmul.f32 %v1660, %v1676
        %v1681 = vmul.f32 %v1661, %v1676
        %v1682 = vmul.f32 %v1662, %v1676
        %v1683 = vmul.f32 %v1663, %v1676
        %v1684 = vmul.f32 %v1664, %v1676
        %v1685 = vmul.f32 %v1665, %v1676
        %v1686 = vmul.f32 %v1666, %v1676
        %v1687 = vmul.f32 %v1667, %v1676
        %v1688 = vmul.f32 %v1668, %v1676
        %v1689 = vmul.f32 %v1669, %v1676
        %v1690 = vmul.f32 %v1670, %v1676
        %v1691 = vmul.f32 %v1671, %v1676
        %v1692 = vmul.f32 %v1672, %v1676
        %v1693 = vmul.f32 %v1673, %v1676
        %vm1694 = vcmask 261120
        %v1695 = vsel %vm1694, %v1678, 0.0
        %1696 = vadd.xlane.f32.xlu0 %v1695
        %v1697 = vpop.xlane.xlu0 %1696
        %v1698 = vsel %vm1694, %v1679, 0.0
        %1699 = vadd.xlane.f32.xlu0 %v1698
        %v1700 = vpop.xlane.xlu0 %1699
        %v1701 = vsel %vm1694, %v1680, 0.0
        %1702 = vadd.xlane.f32.xlu0 %v1701
        %v1703 = vpop.xlane.xlu0 %1702
        %v1704 = vsel %vm1694, %v1681, 0.0
        %1705 = vadd.xlane.f32.xlu0 %v1704
        %v1706 = vpop.xlane.xlu0 %1705
        %v1707 = vsel %vm1694, %v1682, 0.0
        %1708 = vadd.xlane.f32.xlu0 %v1707
        %v1709 = vpop.xlane.xlu0 %1708
        %v1710 = vsel %vm1694, %v1683, 0.0
        %1711 = vadd.xlane.f32.xlu0 %v1710
        %v1712 = vpop.xlane.xlu0 %1711
        %v1713 = vsel %vm1694, %v1684, 0.0
        %1714 = vadd.xlane.f32.xlu0 %v1713
        %v1715 = vpop.xlane.xlu0 %1714
        %v1716 = vsel %vm1694, %v1685, 0.0
        %1717 = vadd.xlane.f32.xlu0 %v1716
        %v1718 = vpop.xlane.xlu0 %1717
        %v1719 = vsel %vm1694, %v1686, 0.0
        %1720 = vadd.xlane.f32.xlu0 %v1719
        %v1721 = vpop.xlane.xlu0 %1720
        %v1722 = vsel %vm1694, %v1687, 0.0
        %1723 = vadd.xlane.f32.xlu0 %v1722
        %v1724 = vpop.xlane.xlu0 %1723
        %v1725 = vsel %vm1694, %v1688, 0.0
        %1726 = vadd.xlane.f32.xlu0 %v1725
        %v1727 = vpop.xlane.xlu0 %1726
        %v1728 = vsel %vm1694, %v1689, 0.0
        %1729 = vadd.xlane.f32.xlu0 %v1728
        %v1730 = vpop.xlane.xlu0 %1729
        %v1731 = vsel %vm1694, %v1690, 0.0
        %1732 = vadd.xlane.f32.xlu0 %v1731
        %v1733 = vpop.xlane.xlu0 %1732
        %v1734 = vsel %vm1694, %v1691, 0.0
        %1735 = vadd.xlane.f32.xlu0 %v1734
        %v1736 = vpop.xlane.xlu0 %1735
        %v1737 = vsel %vm1694, %v1692, 0.0
        %1738 = vadd.xlane.f32.xlu0 %v1737
        %v1739 = vpop.xlane.xlu0 %1738
        %v1740 = vsel %vm1694, %v1693, 0.0
        %1741 = vadd.xlane.f32.xlu0 %v1740
        %v1742 = vpop.xlane.xlu0 %1741
        %v1759 = vlaneseq
        %v1760 = vand.u32 %v1759, 127
        %v1761 = vperm.slane %v1697, %v1760
        %v1762 = vadd.s32 %v1760, 4294967288
        %v1763 = vperm.slane %v1700, %v1762
        %vm1764 = vcmask 130112
        %v1765 = vsel %vm1764, %v1763, %v1761
        %v1766 = vadd.s32 %v1760, 4294967280
        %v1767 = vperm.slane %v1703, %v1766
        %vm1768 = vcmask 195712
        %v1769 = vsel %vm1768, %v1767, %v1765
        %v1770 = vadd.s32 %v1760, 4294967272
        %v1771 = vperm.slane %v1706, %v1770
        %vm1772 = vcmask 261312
        %v1773 = vsel %vm1772, %v1771, %v1769
        %v1774 = vadd.s32 %v1760, 4294967264
        %v1775 = vperm.slane %v1709, %v1774
        %vm1776 = vcmask 326912
        %v1777 = vsel %vm1776, %v1775, %v1773
        %v1778 = vadd.s32 %v1760, 4294967256
        %v1779 = vperm.slane %v1712, %v1778
        %vm1780 = vcmask 392512
        %v1781 = vsel %vm1780, %v1779, %v1777
        %v1782 = vadd.s32 %v1760, 4294967248
        %v1783 = vperm.slane %v1715, %v1782
        %vm1784 = vcmask 458112
        %v1785 = vsel %vm1784, %v1783, %v1781
        %v1786 = vadd.s32 %v1760, 4294967240
        %v1787 = vperm.slane %v1718, %v1786
        %vm1788 = vcmask 523712
        %v1789 = vsel %vm1788, %v1787, %v1785
        %v1790 = vadd.s32 %v1760, 4294967232
        %v1791 = vperm.slane %v1721, %v1790
        %vm1792 = vcmask 589312
        %v1793 = vsel %vm1792, %v1791, %v1789
        %v1794 = vadd.s32 %v1760, 4294967224
        %v1795 = vperm.slane %v1724, %v1794
        %vm1796 = vcmask 654912
        %v1797 = vsel %vm1796, %v1795, %v1793
        %v1798 = vadd.s32 %v1760, 4294967216
        %v1799 = vperm.slane %v1727, %v1798
        %vm1800 = vcmask 720512
        %v1801 = vsel %vm1800, %v1799, %v1797
        %v1802 = vadd.s32 %v1760, 4294967208
        %v1803 = vperm.slane %v1730, %v1802
        %vm1804 = vcmask 786112
        %v1805 = vsel %vm1804, %v1803, %v1801
        %v1806 = vadd.s32 %v1760, 4294967200
        %v1807 = vperm.slane %v1733, %v1806
        %vm1808 = vcmask 851712
        %v1809 = vsel %vm1808, %v1807, %v1805
        %v1810 = vadd.s32 %v1760, 4294967192
        %v1811 = vperm.slane %v1736, %v1810
        %vm1812 = vcmask 917312
        %v1813 = vsel %vm1812, %v1811, %v1809
        %v1814 = vadd.s32 %v1760, 4294967184
        %v1815 = vperm.slane %v1739, %v1814
        %vm1816 = vcmask 982912
        %v1817 = vsel %vm1816, %v1815, %v1813
        %v1818 = vadd.s32 %v1760, 4294967176
        %v1819 = vperm.slane %v1742, %v1818
        %vm1820 = vcmask 1048512
        %v1821 = vsel %vm1820, %v1819, %v1817
        %1823 = vst [vmem:[%s277] sm:$0x1] %v1821
        %s1824 = sand.u32 %s141, 1
        %s1825 = scalar_lea.sflag [#allocation4], %s1824
        %s1826 = sand.u32 %s141, 1
        %s1827 = scalar_lea.vmem [#allocation8], %s1826
        // Predicated region
        $region53: #{tpu_custom_call.1} parent=39 // pred_check
          %p1828 = pneg %p151
        $region54: #{tpu_custom_call.1} parent=39 // pred_check_branch
          %1830 = sbr.rel (%p1828) target = $region56
        $region55: #{tpu_custom_call.1} parent=39 // pred_region
          %1832 = vsyncadd %s1825, 0
          %s1833 = scalar_lea.hbm %s5, %s23
          %s1835 = sshll.u32 %s1827, 4
          %s1836 = int_to_ptr.vmem [resolvable:$true] %s1835
          %s1837 = sshll.u32 %s1833, 4
          %s1838 = int_to_ptr.hbm [resolvable:$true] %s1837
          %1840 = dma.vmem_to_hbm [thread:$0]  %s1836, 16, %s1838, %s1825
        $region56: #{tpu_custom_call.1} parent=39 // pred_fallthru
          _
      $region40: #{tpu_custom_call.1} parent=5 // pred_fallthru
        _
      %p1841 = scmp.le.s32.totalorder 2, %s18
      // Predicated region
      $region57: #{tpu_custom_call.1} parent=5 // pred_check
        %p1842 = pneg %p1841
      $region58: #{tpu_custom_call.1} parent=5 // pred_check_branch
        %1844 = sbr.rel (%p1842) target = $region60
      $region59: #{tpu_custom_call.1} parent=5 // pred_region
        %s1845 = ssub.s32 %s18, 2
        // Predicated region
        $region61: #{tpu_custom_call.1} parent=59 // pred_check
          %p1846 = pneg %p157
        $region62: #{tpu_custom_call.1} parent=59 // pred_check_branch
          %1848 = sbr.rel (%p1846) target = $region64
        $region63: #{tpu_custom_call.1} parent=59 // pred_region
          %s1849 = sand.u32 %s142, 1
          %s1850 = scalar_lea.sflag [#allocation4], %s1849
          %s1851 = sand.u32 %s142, 1
          %s1852 = scalar_lea.vmem [#allocation8], %s1851
          %1854 = dma.done %s1850, 16
        $region64: #{tpu_custom_call.1} parent=59 // pred_fallthru
          _
      $region60: #{tpu_custom_call.1} parent=5 // pred_fallthru
        _
    $region6: #{tpu_custom_call.1} parent=1 // loop_footer
      %s22 = sadd.s32 1, %s18
    $region7: #{tpu_custom_call.1} parent=1 // loop_footer_branch
      %17 = sbr.rel target = $region3
    $region8: #{tpu_custom_call.1} parent=1 // loop_exit
      _
    %1855 = vsyncpa [#allocation3], 1
    %s1856 = scalar_lea.sflag [#allocation3], 1
    %1857 = vsyncpa %s1856, 1
    %1858 = vsyncpa [#allocation6], 1
    %1859 = vsyncpa [#allocation4], 1
    %s1860 = scalar_lea.sflag [#allocation4], 1
    %1861 = vsyncpa %s1860, 1

</llo_original>
